<compile_context>
chip_gen: v5e
topology: v5e:2x2
jax: 0.10.0
libtpu: 0.0.40
codegen_flags: <defaults>
</compile_context>

<pallas_src>
from functools import partial

import jax
import jax.numpy as jnp
from jax.experimental import pallas as pl
from jax.experimental.pallas import tpu as pltpu

KERNEL_SIZE = 3
KERNEL_STRIDE = 2
PADDING = KERNEL_SIZE // 2
BN_EPS = 1e-5

# Feed the MXU with bf16 operands (f32 accumulation) as recommended for v6e/v7x.
# Set to False for strict f32 matmul numerics.
USE_BF16_MATMUL = True

_VMEM = pl.BlockSpec(memory_space=pltpu.MemorySpace.VMEM)


def _round_up(x, m):
    return ((x + m - 1) // m) * m


# ---------------------------------------------------------------------------
# Pallas kernels
# ---------------------------------------------------------------------------
def _matmul_bias_kernel(a_ref, b_ref, bias_ref, o_ref):
    # K fits in a single block for every layer of this model, so there is no
    # reduction grid axis and no accumulator scratch: one dot + fused bias add
    # written straight to the output tile.
    o_ref[...] = (jnp.dot(a_ref[...], b_ref[...],
                          preferred_element_type=jnp.float32)
                  + bias_ref[...]).astype(o_ref.dtype)


def matmul_bias_pallas(a, b, bias, tm_cap=512):
    """(M, K) @ (K, N) + bias -> (M, N) float32.

    K and N blocks span the full (un-padded) extents (allowed when the block
    equals the array dim); M is only padded to the 8-row sublane granularity,
    or tiled by `tm_cap` rows when large.
    """
    M, K = a.shape
    K2, N = b.shape
    assert K == K2
    mm_dtype = jnp.bfloat16 if USE_BF16_MATMUL else jnp.float32
    a = a.astype(mm_dtype)
    b = b.astype(mm_dtype)
    bias2 = bias.reshape(1, N).astype(jnp.float32)

    if M <= tm_cap:
        tm = max(_round_up(M, 8), 8)
        Mp = tm
    else:
        tm = tm_cap
        Mp = _round_up(M, tm)
    if Mp != M:
        a = jnp.pad(a, ((0, Mp - M), (0, 0)))

    out = pl.pallas_call(
        _matmul_bias_kernel,
        out_shape=jax.ShapeDtypeStruct((Mp, N), jnp.float32),
        grid_spec=pltpu.PrefetchScalarGridSpec(
            num_scalar_prefetch=0,
            grid=(Mp // tm,),
            in_specs=[pl.BlockSpec((tm, K), lambda i: (i, 0)),
                      pl.BlockSpec((K, N), lambda i: (0, 0)),
                      pl.BlockSpec((1, N), lambda i: (0, 0))],
            out_specs=pl.BlockSpec((tm, N), lambda i: (i, 0))),
        compiler_params=pltpu.CompilerParams(
            dimension_semantics=("parallel",)),
    )(a, b, bias2)
    return out[:M] if Mp != M else out


def _bn_core(x, g, b, eps):
    # Training-mode BatchNorm (batch statistics, biased variance), channels on
    # lanes, reduction over the N*H*W rows.
    m = x.shape[0]
    mean = jnp.sum(x, axis=0, keepdims=True) * (1.0 / m)
    d = x - mean
    var = jnp.sum(d * d, axis=0, keepdims=True) * (1.0 / m)
    return d * jax.lax.rsqrt(var + eps) * g + b


def _relu_bn_kernel(x_ref, g_ref, b_ref, o_ref, *, eps):
    o_ref[...] = _bn_core(jnp.maximum(x_ref[...], 0.0), g_ref[...], b_ref[...], eps)


def _relu_add_bn_kernel(x_ref, s_ref, g_ref, b_ref, o_ref, *, eps):
    # encoder with recurrent state: BN(relu(x) + state)
    o_ref[...] = _bn_core(jnp.maximum(x_ref[...], 0.0) + s_ref[...],
                          g_ref[...], b_ref[...], eps)


def _add_relu_bn_kernel(x_ref, r_ref, g_ref, b_ref, s_ref, o_ref, *, eps):
    # decoder: s = x + residual (new recurrent state, pre-ReLU); y = BN(relu(s))
    s = x_ref[...] + r_ref[...]
    s_ref[...] = s
    o_ref[...] = _bn_core(jnp.maximum(s, 0.0), g_ref[...], b_ref[...], eps)


# TODO(synk): BN/head kernels run whole-array in VMEM (activations here are a
# few KiB); block the N*H*W axis with sum/sumsq accumulators for large inputs.
def relu_bn(x2, gamma, beta):
    C = x2.shape[1]
    return pl.pallas_call(
        partial(_relu_bn_kernel, eps=BN_EPS),
        out_shape=jax.ShapeDtypeStruct(x2.shape, jnp.float32),
        in_specs=[_VMEM, _VMEM, _VMEM],
        out_specs=_VMEM,
    )(x2, gamma.reshape(1, C).astype(jnp.float32),
      beta.reshape(1, C).astype(jnp.float32))


def relu_add_bn(x2, state2, gamma, beta):
    C = x2.shape[1]
    return pl.pallas_call(
        partial(_relu_add_bn_kernel, eps=BN_EPS),
        out_shape=jax.ShapeDtypeStruct(x2.shape, jnp.float32),
        in_specs=[_VMEM, _VMEM, _VMEM, _VMEM],
        out_specs=_VMEM,
    )(x2, state2, gamma.reshape(1, C).astype(jnp.float32),
      beta.reshape(1, C).astype(jnp.float32))


def add_relu_bn(x2, res2, gamma, beta):
    C = x2.shape[1]
    return pl.pallas_call(
        partial(_add_relu_bn_kernel, eps=BN_EPS),
        out_shape=(jax.ShapeDtypeStruct(x2.shape, jnp.float32),
                   jax.ShapeDtypeStruct(x2.shape, jnp.float32)),
        in_specs=[_VMEM, _VMEM, _VMEM, _VMEM],
        out_specs=(_VMEM, _VMEM),
    )(x2, res2, gamma.reshape(1, C).astype(jnp.float32),
      beta.reshape(1, C).astype(jnp.float32))


def _head_kernel(r_ref, w_ref, b_ref, xm_ref, vid_ref, *, inv_hw):
    r = r_ref[...]                                   # (N, H*W, C)
    xm = jnp.sum(r, axis=1) * inv_hw                 # global average pool -> (N, C)
    xm_ref[...] = xm
    # Tiny (batch x emb) @ (emb x nvid) linear; computed on the VPU because the
    # M dim is only the batch size (an MXU push would be almost fully masked).
    vid_ref[...] = jnp.sum(xm[:, :, None] * w_ref[...][None, :, :], axis=1) + b_ref[...]


def head_pallas(r_nhwc, stab_w, stab_b):
    N, H, W, C = r_nhwc.shape
    nvid = stab_w.shape[0]
    r3 = r_nhwc.reshape(N, H * W, C)
    return pl.pallas_call(
        partial(_head_kernel, inv_hw=1.0 / (H * W)),
        out_shape=(jax.ShapeDtypeStruct((N, C), jnp.float32),
                   jax.ShapeDtypeStruct((N, nvid), jnp.float32)),
        in_specs=[_VMEM, _VMEM, _VMEM],
        out_specs=(_VMEM, _VMEM),
    )(r3, stab_w.T.astype(jnp.float32),
      stab_b.reshape(1, nvid).astype(jnp.float32))


# ---------------------------------------------------------------------------
# Conv lowering glue (NHWC, plain JAX) feeding the Pallas matmul
# ---------------------------------------------------------------------------
def _im2col_nhwc(x, k, stride, pad):
    # TODO(synk): patch gather stays in XLA; it could be fused into the matmul
    # via an Element-indexed A BlockSpec to avoid the 9x patch materialization.
    N, H, W, C = x.shape
    xp = jnp.pad(x, ((0, 0), (pad, pad), (pad, pad), (0, 0)))
    Hp, Wp = H + 2 * pad, W + 2 * pad
    Ho = (Hp - k) // stride + 1
    Wo = (Wp - k) // stride + 1
    cols = []
    for ki in range(k):
        for kj in range(k):
            cols.append(xp[:, ki:ki + stride * (Ho - 1) + 1:stride,
                           kj:kj + stride * (Wo - 1) + 1:stride, :])
    patches = jnp.stack(cols, axis=3)                 # (N, Ho, Wo, k*k, C)
    return patches.reshape(N * Ho * Wo, k * k * C), Ho, Wo


def conv2d_nhwc(x, w, b):
    """Conv2d k=3, s=2, p=1 on NHWC input; weight in PyTorch (Cout, Cin, 3, 3)."""
    N = x.shape[0]
    Cout = w.shape[0]
    cols, Ho, Wo = _im2col_nhwc(x, KERNEL_SIZE, KERNEL_STRIDE=KERNEL_STRIDE
                                if False else KERNEL_STRIDE, pad=PADDING) \
        if False else _im2col_nhwc(x, KERNEL_SIZE, KERNEL_STRIDE, PADDING)
    wm = jnp.transpose(w, (2, 3, 1, 0)).reshape(-1, Cout)   # (9*Cin, Cout), (ki,kj,c) order
    out = matmul_bias_pallas(cols, wm, b)
    return out.reshape(N, Ho, Wo, Cout)


def conv_transpose2d_nhwc(x, w, b, out_h, out_w):
    """ConvTranspose2d k=3, s=2, p=1; weight in PyTorch (Cin, Cout, 3, 3) layout.

    Lowered as (N*Hi*Wi, Cin) @ (Cin, 9*Cout) on the MXU (no zero-dilated
    input), then a col2im scatter-add; bias is folded into the output init.
    """
    N, Hi, Wi, Cin = x.shape
    Cout = w.shape[1]
    k = KERNEL_SIZE
    wm = jnp.transpose(w, (0, 2, 3, 1)).reshape(Cin, k * k * Cout)
    zero_bias = jnp.zeros((k * k * Cout,), jnp.float32)
    contrib = matmul_bias_pallas(x.reshape(N * Hi * Wi, Cin), wm, zero_bias)
    contrib = contrib.reshape(N, Hi, Wi, k, k, Cout)

    # Output index: oy = iy*stride - PADDING + ki  ->  padded index oy+1.
    Hp = KERNEL_STRIDE * Hi + 1
    Wp = KERNEL_STRIDE * Wi + 1
    out = jnp.broadcast_to(b.astype(jnp.float32), (N, Hp, Wp, Cout))
    # TODO(synk): col2im scatter-add kept in XLA; could become a Pallas epilogue.
    for ki in range(k):
        for kj in range(k):
            out = out.at[:, ki:ki + KERNEL_STRIDE * Hi:KERNEL_STRIDE,
                         kj:kj + KERNEL_STRIDE * Wi:KERNEL_STRIDE, :].add(
                contrib[:, :, :, ki, kj, :])
    return out[:, 1:1 + out_h, 1:1 + out_w, :]


# ---------------------------------------------------------------------------
# Model01 parameters + forward
# ---------------------------------------------------------------------------
def init_params(key, network_size):
    hidden = len(network_size) - 2
    params = {}
    for layer in range(hidden):
        cin, cout = network_size[layer], network_size[layer + 1]
        key, k1, k2, k3, k4 = jax.random.split(key, 5)
        params[f"D_{layer+1}_w"] = 0.1 * jax.random.normal(k1, (cout, cin, 3, 3), jnp.float32)
        params[f"D_{layer+1}_b"] = 0.1 * jax.random.normal(k2, (cout,), jnp.float32)
        # ConvTranspose2d weight layout: (in_channels=cout, out_channels=cin, 3, 3)
        params[f"G_{layer+1}_w"] = 0.1 * jax.random.normal(k3, (cout, cin, 3, 3), jnp.float32)
        params[f"G_{layer+1}_b"] = 0.1 * jax.random.normal(k4, (cin,), jnp.float32)
        params[f"BN_D_{layer+1}_g"] = jnp.ones((cout,), jnp.float32)
        params[f"BN_D_{layer+1}_b"] = jnp.zeros((cout,), jnp.float32)
        params[f"BN_G_{layer+1}_g"] = jnp.ones((cin,), jnp.float32)
        params[f"BN_G_{layer+1}_b"] = jnp.zeros((cin,), jnp.float32)
    emb, nvid = network_size[-2], network_size[-1]
    key, k1, k2 = jax.random.split(key, 3)
    params["stab_w"] = 0.1 * jax.random.normal(k1, (nvid, emb), jnp.float32)
    params["stab_b"] = 0.1 * jax.random.normal(k2, (nvid,), jnp.float32)
    return params


def model01_forward(params, x, state, network_size):
    hidden = len(network_size) - 2
    xh = jnp.transpose(x, (0, 2, 3, 1)).astype(jnp.float32)   # NCHW -> NHWC once
    spatial = [(xh.shape[1], xh.shape[2])]
    residuals = []

    # ---------------- encoder (D path) ----------------
    for layer in range(hidden):
        xh = conv2d_nhwc(xh, params[f"D_{layer+1}_w"], params[f"D_{layer+1}_b"])
        residuals.append(xh)
        N_, H_, W_, C_ = xh.shape
        spatial.append((H_, W_))
        g, be = params[f"BN_D_{layer+1}_g"], params[f"BN_D_{layer+1}_b"]
        x2 = xh.reshape(N_ * H_ * W_, C_)
        if layer < hidden - 1 and state is not None:
            s2 = jnp.transpose(state[layer], (0, 2, 3, 1)).astype(jnp.float32)
            x2 = relu_add_bn(x2, s2.reshape(N_ * H_ * W_, C_), g, be)
        else:
            x2 = relu_bn(x2, g, be)                     # fused ReLU -> BN
        xh = x2.reshape(N_, H_, W_, C_)

    new_state = [None] * (hidden - 1)

    # ---------------- decoder (G path) ----------------
    for layer in reversed(range(hidden)):
        tgt_h, tgt_w = spatial[layer]
        xh = conv_transpose2d_nhwc(xh, params[f"G_{layer+1}_w"],
                                   params[f"G_{layer+1}_b"], tgt_h, tgt_w)
        N_, H_, W_, C_ = xh.shape
        g, be = params[f"BN_G_{layer+1}_g"], params[f"BN_G_{layer+1}_b"]
        x2 = xh.reshape(N_ * H_ * W_, C_)
        if layer:
            r2 = residuals[layer - 1].reshape(N_ * H_ * W_, C_)
            s2, y2 = add_relu_bn(x2, r2, g, be)          # fused add + state + ReLU + BN
            new_state[layer - 1] = jnp.transpose(s2.reshape(N_, H_, W_, C_), (0, 3, 1, 2))
            xh = y2.reshape(N_, H_, W_, C_)
        else:
            xh = relu_bn(x2, g, be).reshape(N_, H_, W_, C_)

    # ---------------- head (avg pool + stabiliser, fused) ----------------
    xm, video_index = head_pallas(residuals[-1], params["stab_w"], params["stab_b"])
    x_out = jnp.transpose(xh, (0, 3, 1, 2))              # back to NCHW at the boundary
    x_mean = xm.reshape(xm.shape[0], xm.shape[1], 1, 1)
    return (x_out, new_state), (x_mean, video_index)


if __name__ == "__main__":
    network_size = (4, 8, 16, 10)          # (n, h1, emb_size, nb_videos) -> 2 hidden layers
    input_spatial_size = (16, 16)
    batch = 2

    key = jax.random.PRNGKey(0)
    kp, kx = jax.random.split(key)
    params = init_params(kp, network_size)
    x = jax.random.normal(kx, (batch, network_size[0]) + input_spatial_size, jnp.float32)

    fwd = jax.jit(lambda p, inp, st: model01_forward(p, inp, st, network_size))

    # first call: no recurrent state
    (y, state), (x_mean, video_index) = fwd(params, x, None)
    # second call: feed the state back in (exercises the state-add branch)
    out2 = fwd(params, x, state)

    jax.block_until_ready(((y, state), (x_mean, video_index)))
    jax.block_until_ready(out2)

    assert y.shape == x.shape
    assert state[0].shape == (batch, network_size[1], 8, 8)
    assert x_mean.shape == (batch, network_size[-2], 1, 1)
    assert video_index.shape == (batch, network_size[-1])
    print("KERNEL_OK")
</pallas_src>

<mosaic_0001>
module attributes {stable_mosaic.version = 11 : i64} {
  func.func @_matmul_bias_kernel(%arg0: i32, %arg1: memref<128x36xbf16, #tpu.memory_space<vmem>>, %arg2: memref<36x8xbf16, #tpu.memory_space<vmem>>, %arg3: memref<1x8xf32, #tpu.memory_space<vmem>>, %arg4: memref<128x8xf32, #tpu.memory_space<vmem>>) attributes {dimension_semantics = [#tpu.dimension_semantics<parallel>], iteration_bounds = array<i64: 1>, scalar_prefetch = 0 : i64, scratch_operands = 0 : i64, tpu.core_type = #tpu.core_type<tc>, window_params = [{transform_indices = @transform_0, window_bounds = array<i64: 128, 36>}, {pipeline_mode = #tpu.pipeline_mode<synchronous>, transform_indices = @transform_1, window_bounds = array<i64: 36, 8>}, {pipeline_mode = #tpu.pipeline_mode<synchronous>, transform_indices = @transform_2, window_bounds = array<i64: 1, 8>}, {transform_indices = @transform_3, window_bounds = array<i64: 128, 8>}]} {
    %c0 = arith.constant 0 : index
    %c0_0 = arith.constant 0 : index
    %0 = vector.load %arg1[%c0, %c0_0] : memref<128x36xbf16, #tpu.memory_space<vmem>>, vector<128x36xbf16>
    %c0_1 = arith.constant 0 : index
    %c0_2 = arith.constant 0 : index
    %1 = vector.load %arg2[%c0_1, %c0_2] : memref<36x8xbf16, #tpu.memory_space<vmem>>, vector<36x8xbf16>
    %cst = arith.constant dense<0.000000e+00> : vector<128x8xf32>
    %2 = tpu.matmul %0, %1, %cst {dimension_numbers = #tpu.dot_dimension_numbers<[1], [0], [0], [1], [0, 0, 1, 1], [], []>} : vector<128x36xbf16>, vector<36x8xbf16>, vector<128x8xf32> -> vector<128x8xf32>
    %c0_3 = arith.constant 0 : index
    %c0_4 = arith.constant 0 : index
    %3 = vector.load %arg3[%c0_3, %c0_4] : memref<1x8xf32, #tpu.memory_space<vmem>>, vector<1x8xf32>
    %4 = vector.broadcast %3 : vector<1x8xf32> to vector<128x8xf32>
    %5 = arith.addf %2, %4 : vector<128x8xf32>
    %c0_5 = arith.constant 0 : index
    %c0_6 = arith.constant 0 : index
    %6 = vector.load %arg4[%c0_5, %c0_6] : memref<128x8xf32, #tpu.memory_space<vmem>>, vector<128x8xf32>
    tpu.vector_store %arg4[%c0_5, %c0_6], %5 {strides = array<i32>} : memref<128x8xf32, #tpu.memory_space<vmem>>, vector<128x8xf32>,
    return
  }
  func.func @transform_0(%arg0: i32) -> (i32, i32) {
    %c0_i32 = arith.constant 0 : i32
    %c0_i32_0 = arith.constant 0 : i32
    return %arg0, %c0_i32 : i32, i32
  }
  func.func @transform_1(%arg0: i32) -> (i32, i32) {
    %c0_i32 = arith.constant 0 : i32
    %c0_i32_0 = arith.constant 0 : i32
    %c0_i32_1 = arith.constant 0 : i32
    return %c0_i32, %c0_i32_0 : i32, i32
  }
  func.func @transform_2(%arg0: i32) -> (i32, i32) {
    %c0_i32 = arith.constant 0 : i32
    %c0_i32_0 = arith.constant 0 : i32
    %c0_i32_1 = arith.constant 0 : i32
    return %c0_i32, %c0_i32_0 : i32, i32
  }
  func.func @transform_3(%arg0: i32) -> (i32, i32) {
    %c0_i32 = arith.constant 0 : i32
    %c0_i32_0 = arith.constant 0 : i32
    return %arg0, %c0_i32 : i32, i32
  }
}

module attributes {stable_mosaic.version = 11 : i64} {
  func.func @_relu_bn_kernel(%arg0: memref<128x8xf32, #tpu.memory_space<vmem>>, %arg1: memref<1x8xf32, #tpu.memory_space<vmem>>, %arg2: memref<1x8xf32, #tpu.memory_space<vmem>>, %arg3: memref<128x8xf32, #tpu.memory_space<vmem>>) attributes {dimension_semantics = [], scalar_prefetch = 0 : i64, scratch_operands = 0 : i64, tpu.core_type = #tpu.core_type<tc>} {
    %c0 = arith.constant 0 : index
    %c0_0 = arith.constant 0 : index
    %0 = vector.load %arg0[%c0, %c0_0] : memref<128x8xf32, #tpu.memory_space<vmem>>, vector<128x8xf32>
    %cst = arith.constant 0.000000e+00 : f32
    %1 = vector.broadcast %cst : f32 to vector<128x8xf32>
    %2 = arith.maximumf %0, %1 : vector<128x8xf32>
    %c0_1 = arith.constant 0 : index
    %c0_2 = arith.constant 0 : index
    %3 = vector.load %arg1[%c0_1, %c0_2] : memref<1x8xf32, #tpu.memory_space<vmem>>, vector<1x8xf32>
    %c0_3 = arith.constant 0 : index
    %c0_4 = arith.constant 0 : index
    %4 = vector.load %arg2[%c0_3, %c0_4] : memref<1x8xf32, #tpu.memory_space<vmem>>, vector<1x8xf32>
    %cst_5 = arith.constant dense<0.000000e+00> : vector<8xf32>
    %5 = vector.multi_reduction <add>, %2, %cst_5 [0] : vector<128x8xf32> to vector<8xf32>
    %6 = vector.shape_cast %5 : vector<8xf32> to vector<1x8xf32>
    %cst_6 = arith.constant 7.812500e-03 : f32
    %7 = vector.broadcast %cst_6 : f32 to vector<1x8xf32>
    %8 = arith.mulf %6, %7 : vector<1x8xf32>
    %9 = vector.broadcast %8 : vector<1x8xf32> to vector<128x8xf32>
    %10 = arith.subf %2, %9 : vector<128x8xf32>
    %11 = arith.mulf %10, %10 : vector<128x8xf32>
    %cst_7 = arith.constant dense<0.000000e+00> : vector<8xf32>
    %12 = vector.multi_reduction <add>, %11, %cst_7 [0] : vector<128x8xf32> to vector<8xf32>
    %13 = vector.shape_cast %12 : vector<8xf32> to vector<1x8xf32>
    %cst_8 = arith.constant 7.812500e-03 : f32
    %14 = vector.broadcast %cst_8 : f32 to vector<1x8xf32>
    %15 = arith.mulf %13, %14 : vector<1x8xf32>
    %cst_9 = arith.constant 9.99999974E-6 : f32
    %16 = vector.broadcast %cst_9 : f32 to vector<1x8xf32>
    %17 = arith.addf %15, %16 : vector<1x8xf32>
    %18 = math.rsqrt %17 : vector<1x8xf32>
    %19 = vector.broadcast %18 : vector<1x8xf32> to vector<128x8xf32>
    %20 = arith.mulf %10, %19 : vector<128x8xf32>
    %21 = vector.broadcast %3 : vector<1x8xf32> to vector<128x8xf32>
    %22 = arith.mulf %20, %21 : vector<128x8xf32>
    %23 = vector.broadcast %4 : vector<1x8xf32> to vector<128x8xf32>
    %24 = arith.addf %22, %23 : vector<128x8xf32>
    %c0_10 = arith.constant 0 : index
    %c0_11 = arith.constant 0 : index
    %25 = vector.load %arg3[%c0_10, %c0_11] : memref<128x8xf32, #tpu.memory_space<vmem>>, vector<128x8xf32>
    tpu.vector_store %arg3[%c0_10, %c0_11], %24 {strides = array<i32>} : memref<128x8xf32, #tpu.memory_space<vmem>>, vector<128x8xf32>,
    return
  }
}

module attributes {stable_mosaic.version = 11 : i64} {
  func.func @_matmul_bias_kernel(%arg0: i32, %arg1: memref<32x72xbf16, #tpu.memory_space<vmem>>, %arg2: memref<72x16xbf16, #tpu.memory_space<vmem>>, %arg3: memref<1x16xf32, #tpu.memory_space<vmem>>, %arg4: memref<32x16xf32, #tpu.memory_space<vmem>>) attributes {dimension_semantics = [#tpu.dimension_semantics<parallel>], iteration_bounds = array<i64: 1>, scalar_prefetch = 0 : i64, scratch_operands = 0 : i64, tpu.core_type = #tpu.core_type<tc>, window_params = [{transform_indices = @transform_0, window_bounds = array<i64: 32, 72>}, {pipeline_mode = #tpu.pipeline_mode<synchronous>, transform_indices = @transform_1, window_bounds = array<i64: 72, 16>}, {pipeline_mode = #tpu.pipeline_mode<synchronous>, transform_indices = @transform_2, window_bounds = array<i64: 1, 16>}, {transform_indices = @transform_3, window_bounds = array<i64: 32, 16>}]} {
    %c0 = arith.constant 0 : index
    %c0_0 = arith.constant 0 : index
    %0 = vector.load %arg1[%c0, %c0_0] : memref<32x72xbf16, #tpu.memory_space<vmem>>, vector<32x72xbf16>
    %c0_1 = arith.constant 0 : index
    %c0_2 = arith.constant 0 : index
    %1 = vector.load %arg2[%c0_1, %c0_2] : memref<72x16xbf16, #tpu.memory_space<vmem>>, vector<72x16xbf16>
    %cst = arith.constant dense<0.000000e+00> : vector<32x16xf32>
    %2 = tpu.matmul %0, %1, %cst {dimension_numbers = #tpu.dot_dimension_numbers<[1], [0], [0], [1], [0, 0, 1, 1], [], []>} : vector<32x72xbf16>, vector<72x16xbf16>, vector<32x16xf32> -> vector<32x16xf32>
    %c0_3 = arith.constant 0 : index
    %c0_4 = arith.constant 0 : index
    %3 = vector.load %arg3[%c0_3, %c0_4] : memref<1x16xf32, #tpu.memory_space<vmem>>, vector<1x16xf32>
    %4 = vector.broadcast %3 : vector<1x16xf32> to vector<32x16xf32>
    %5 = arith.addf %2, %4 : vector<32x16xf32>
    %c0_5 = arith.constant 0 : index
    %c0_6 = arith.constant 0 : index
    %6 = vector.load %arg4[%c0_5, %c0_6] : memref<32x16xf32, #tpu.memory_space<vmem>>, vector<32x16xf32>
    tpu.vector_store %arg4[%c0_5, %c0_6], %5 {strides = array<i32>} : memref<32x16xf32, #tpu.memory_space<vmem>>, vector<32x16xf32>,
    return
  }
  func.func @transform_0(%arg0: i32) -> (i32, i32) {
    %c0_i32 = arith.constant 0 : i32
    %c0_i32_0 = arith.constant 0 : i32
    return %arg0, %c0_i32 : i32, i32
  }
  func.func @transform_1(%arg0: i32) -> (i32, i32) {
    %c0_i32 = arith.constant 0 : i32
    %c0_i32_0 = arith.constant 0 : i32
    %c0_i32_1 = arith.constant 0 : i32
    return %c0_i32, %c0_i32_0 : i32, i32
  }
  func.func @transform_2(%arg0: i32) -> (i32, i32) {
    %c0_i32 = arith.constant 0 : i32
    %c0_i32_0 = arith.constant 0 : i32
    %c0_i32_1 = arith.constant 0 : i32
    return %c0_i32, %c0_i32_0 : i32, i32
  }
  func.func @transform_3(%arg0: i32) -> (i32, i32) {
    %c0_i32 = arith.constant 0 : i32
    %c0_i32_0 = arith.constant 0 : i32
    return %arg0, %c0_i32 : i32, i32
  }
}

module attributes {stable_mosaic.version = 11 : i64} {
  func.func @_relu_bn_kernel(%arg0: memref<32x16xf32, #tpu.memory_space<vmem>>, %arg1: memref<1x16xf32, #tpu.memory_space<vmem>>, %arg2: memref<1x16xf32, #tpu.memory_space<vmem>>, %arg3: memref<32x16xf32, #tpu.memory_space<vmem>>) attributes {dimension_semantics = [], scalar_prefetch = 0 : i64, scratch_operands = 0 : i64, tpu.core_type = #tpu.core_type<tc>} {
    %c0 = arith.constant 0 : index
    %c0_0 = arith.constant 0 : index
    %0 = vector.load %arg0[%c0, %c0_0] : memref<32x16xf32, #tpu.memory_space<vmem>>, vector<32x16xf32>
    %cst = arith.constant 0.000000e+00 : f32
    %1 = vector.broadcast %cst : f32 to vector<32x16xf32>
    %2 = arith.maximumf %0, %1 : vector<32x16xf32>
    %c0_1 = arith.constant 0 : index
    %c0_2 = arith.constant 0 : index
    %3 = vector.load %arg1[%c0_1, %c0_2] : memref<1x16xf32, #tpu.memory_space<vmem>>, vector<1x16xf32>
    %c0_3 = arith.constant 0 : index
    %c0_4 = arith.constant 0 : index
    %4 = vector.load %arg2[%c0_3, %c0_4] : memref<1x16xf32, #tpu.memory_space<vmem>>, vector<1x16xf32>
    %cst_5 = arith.constant dense<0.000000e+00> : vector<16xf32>
    %5 = vector.multi_reduction <add>, %2, %cst_5 [0] : vector<32x16xf32> to vector<16xf32>
    %6 = vector.shape_cast %5 : vector<16xf32> to vector<1x16xf32>
    %cst_6 = arith.constant 3.125000e-02 : f32
    %7 = vector.broadcast %cst_6 : f32 to vector<1x16xf32>
    %8 = arith.mulf %6, %7 : vector<1x16xf32>
    %9 = vector.broadcast %8 : vector<1x16xf32> to vector<32x16xf32>
    %10 = arith.subf %2, %9 : vector<32x16xf32>
    %11 = arith.mulf %10, %10 : vector<32x16xf32>
    %cst_7 = arith.constant dense<0.000000e+00> : vector<16xf32>
    %12 = vector.multi_reduction <add>, %11, %cst_7 [0] : vector<32x16xf32> to vector<16xf32>
    %13 = vector.shape_cast %12 : vector<16xf32> to vector<1x16xf32>
    %cst_8 = arith.constant 3.125000e-02 : f32
    %14 = vector.broadcast %cst_8 : f32 to vector<1x16xf32>
    %15 = arith.mulf %13, %14 : vector<1x16xf32>
    %cst_9 = arith.constant 9.99999974E-6 : f32
    %16 = vector.broadcast %cst_9 : f32 to vector<1x16xf32>
    %17 = arith.addf %15, %16 : vector<1x16xf32>
    %18 = math.rsqrt %17 : vector<1x16xf32>
    %19 = vector.broadcast %18 : vector<1x16xf32> to vector<32x16xf32>
    %20 = arith.mulf %10, %19 : vector<32x16xf32>
    %21 = vector.broadcast %3 : vector<1x16xf32> to vector<32x16xf32>
    %22 = arith.mulf %20, %21 : vector<32x16xf32>
    %23 = vector.broadcast %4 : vector<1x16xf32> to vector<32x16xf32>
    %24 = arith.addf %22, %23 : vector<32x16xf32>
    %c0_10 = arith.constant 0 : index
    %c0_11 = arith.constant 0 : index
    %25 = vector.load %arg3[%c0_10, %c0_11] : memref<32x16xf32, #tpu.memory_space<vmem>>, vector<32x16xf32>
    tpu.vector_store %arg3[%c0_10, %c0_11], %24 {strides = array<i32>} : memref<32x16xf32, #tpu.memory_space<vmem>>, vector<32x16xf32>,
    return
  }
}

module attributes {stable_mosaic.version = 11 : i64} {
  func.func @_matmul_bias_kernel(%arg0: i32, %arg1: memref<32x16xbf16, #tpu.memory_space<vmem>>, %arg2: memref<16x72xbf16, #tpu.memory_space<vmem>>, %arg3: memref<1x72xf32, #tpu.memory_space<vmem>>, %arg4: memref<32x72xf32, #tpu.memory_space<vmem>>) attributes {dimension_semantics = [#tpu.dimension_semantics<parallel>], iteration_bounds = array<i64: 1>, scalar_prefetch = 0 : i64, scratch_operands = 0 : i64, tpu.core_type = #tpu.core_type<tc>, window_params = [{transform_indices = @transform_0, window_bounds = array<i64: 32, 16>}, {pipeline_mode = #tpu.pipeline_mode<synchronous>, transform_indices = @transform_1, window_bounds = array<i64: 16, 72>}, {pipeline_mode = #tpu.pipeline_mode<synchronous>, transform_indices = @transform_2, window_bounds = array<i64: 1, 72>}, {transform_indices = @transform_3, window_bounds = array<i64: 32, 72>}]} {
    %c0 = arith.constant 0 : index
    %c0_0 = arith.constant 0 : index
    %0 = vector.load %arg1[%c0, %c0_0] : memref<32x16xbf16, #tpu.memory_space<vmem>>, vector<32x16xbf16>
    %c0_1 = arith.constant 0 : index
    %c0_2 = arith.constant 0 : index
    %1 = vector.load %arg2[%c0_1, %c0_2] : memref<16x72xbf16, #tpu.memory_space<vmem>>, vector<16x72xbf16>
    %cst = arith.constant dense<0.000000e+00> : vector<32x72xf32>
    %2 = tpu.matmul %0, %1, %cst {dimension_numbers = #tpu.dot_dimension_numbers<[1], [0], [0], [1], [0, 0, 1, 1], [], []>} : vector<32x16xbf16>, vector<16x72xbf16>, vector<32x72xf32> -> vector<32x72xf32>
    %c0_3 = arith.constant 0 : index
    %c0_4 = arith.constant 0 : index
    %3 = vector.load %arg3[%c0_3, %c0_4] : memref<1x72xf32, #tpu.memory_space<vmem>>, vector<1x72xf32>
    %4 = vector.broadcast %3 : vector<1x72xf32> to vector<32x72xf32>
    %5 = arith.addf %2, %4 : vector<32x72xf32>
    %c0_5 = arith.constant 0 : index
    %c0_6 = arith.constant 0 : index
    %6 = vector.load %arg4[%c0_5, %c0_6] : memref<32x72xf32, #tpu.memory_space<vmem>>, vector<32x72xf32>
    tpu.vector_store %arg4[%c0_5, %c0_6], %5 {strides = array<i32>} : memref<32x72xf32, #tpu.memory_space<vmem>>, vector<32x72xf32>,
    return
  }
  func.func @transform_0(%arg0: i32) -> (i32, i32) {
    %c0_i32 = arith.constant 0 : i32
    %c0_i32_0 = arith.constant 0 : i32
    return %arg0, %c0_i32 : i32, i32
  }
  func.func @transform_1(%arg0: i32) -> (i32, i32) {
    %c0_i32 = arith.constant 0 : i32
    %c0_i32_0 = arith.constant 0 : i32
    %c0_i32_1 = arith.constant 0 : i32
    return %c0_i32, %c0_i32_0 : i32, i32
  }
  func.func @transform_2(%arg0: i32) -> (i32, i32) {
    %c0_i32 = arith.constant 0 : i32
    %c0_i32_0 = arith.constant 0 : i32
    %c0_i32_1 = arith.constant 0 : i32
    return %c0_i32, %c0_i32_0 : i32, i32
  }
  func.func @transform_3(%arg0: i32) -> (i32, i32) {
    %c0_i32 = arith.constant 0 : i32
    %c0_i32_0 = arith.constant 0 : i32
    return %arg0, %c0_i32 : i32, i32
  }
}

module attributes {stable_mosaic.version = 11 : i64} {
  func.func @_add_relu_bn_kernel(%arg0: memref<128x8xf32, #tpu.memory_space<vmem>>, %arg1: memref<128x8xf32, #tpu.memory_space<vmem>>, %arg2: memref<1x8xf32, #tpu.memory_space<vmem>>, %arg3: memref<1x8xf32, #tpu.memory_space<vmem>>, %arg4: memref<128x8xf32, #tpu.memory_space<vmem>>, %arg5: memref<128x8xf32, #tpu.memory_space<vmem>>) attributes {dimension_semantics = [], scalar_prefetch = 0 : i64, scratch_operands = 0 : i64, tpu.core_type = #tpu.core_type<tc>} {
    %c0 = arith.constant 0 : index
    %c0_0 = arith.constant 0 : index
    %0 = vector.load %arg0[%c0, %c0_0] : memref<128x8xf32, #tpu.memory_space<vmem>>, vector<128x8xf32>
    %c0_1 = arith.constant 0 : index
    %c0_2 = arith.constant 0 : index
    %1 = vector.load %arg1[%c0_1, %c0_2] : memref<128x8xf32, #tpu.memory_space<vmem>>, vector<128x8xf32>
    %2 = arith.addf %0, %1 : vector<128x8xf32>
    %c0_3 = arith.constant 0 : index
    %c0_4 = arith.constant 0 : index
    %3 = vector.load %arg4[%c0_3, %c0_4] : memref<128x8xf32, #tpu.memory_space<vmem>>, vector<128x8xf32>
    tpu.vector_store %arg4[%c0_3, %c0_4], %2 {strides = array<i32>} : memref<128x8xf32, #tpu.memory_space<vmem>>, vector<128x8xf32>,
    %cst = arith.constant 0.000000e+00 : f32
    %4 = vector.broadcast %cst : f32 to vector<128x8xf32>
    %5 = arith.maximumf %2, %4 : vector<128x8xf32>
    %c0_5 = arith.constant 0 : index
    %c0_6 = arith.constant 0 : index
    %6 = vector.load %arg2[%c0_5, %c0_6] : memref<1x8xf32, #tpu.memory_space<vmem>>, vector<1x8xf32>
    %c0_7 = arith.constant 0 : index
    %c0_8 = arith.constant 0 : index
    %7 = vector.load %arg3[%c0_7, %c0_8] : memref<1x8xf32, #tpu.memory_space<vmem>>, vector<1x8xf32>
    %cst_9 = arith.constant dense<0.000000e+00> : vector<8xf32>
    %8 = vector.multi_reduction <add>, %5, %cst_9 [0] : vector<128x8xf32> to vector<8xf32>
    %9 = vector.shape_cast %8 : vector<8xf32> to vector<1x8xf32>
    %cst_10 = arith.constant 7.812500e-03 : f32
    %10 = vector.broadcast %cst_10 : f32 to vector<1x8xf32>
    %11 = arith.mulf %9, %10 : vector<1x8xf32>
    %12 = vector.broadcast %11 : vector<1x8xf32> to vector<128x8xf32>
    %13 = arith.subf %5, %12 : vector<128x8xf32>
    %14 = arith.mulf %13, %13 : vector<128x8xf32>
    %cst_11 = arith.constant dense<0.000000e+00> : vector<8xf32>
    %15 = vector.multi_reduction <add>, %14, %cst_11 [0] : vector<128x8xf32> to vector<8xf32>
    %16 = vector.shape_cast %15 : vector<8xf32> to vector<1x8xf32>
    %cst_12 = arith.constant 7.812500e-03 : f32
    %17 = vector.broadcast %cst_12 : f32 to vector<1x8xf32>
    %18 = arith.mulf %16, %17 : vector<1x8xf32>
    %cst_13 = arith.constant 9.99999974E-6 : f32
    %19 = vector.broadcast %cst_13 : f32 to vector<1x8xf32>
    %20 = arith.addf %18, %19 : vector<1x8xf32>
    %21 = math.rsqrt %20 : vector<1x8xf32>
    %22 = vector.broadcast %21 : vector<1x8xf32> to vector<128x8xf32>
    %23 = arith.mulf %13, %22 : vector<128x8xf32>
    %24 = vector.broadcast %6 : vector<1x8xf32> to vector<128x8xf32>
    %25 = arith.mulf %23, %24 : vector<128x8xf32>
    %26 = vector.broadcast %7 : vector<1x8xf32> to vector<128x8xf32>
    %27 = arith.addf %25, %26 : vector<128x8xf32>
    %c0_14 = arith.constant 0 : index
    %c0_15 = arith.constant 0 : index
    %28 = vector.load %arg5[%c0_14, %c0_15] : memref<128x8xf32, #tpu.memory_space<vmem>>, vector<128x8xf32>
    tpu.vector_store %arg5[%c0_14, %c0_15], %27 {strides = array<i32>} : memref<128x8xf32, #tpu.memory_space<vmem>>, vector<128x8xf32>,
    return
  }
}

module attributes {stable_mosaic.version = 11 : i64} {
  func.func @_matmul_bias_kernel(%arg0: i32, %arg1: memref<128x8xbf16, #tpu.memory_space<vmem>>, %arg2: memref<8x36xbf16, #tpu.memory_space<vmem>>, %arg3: memref<1x36xf32, #tpu.memory_space<vmem>>, %arg4: memref<128x36xf32, #tpu.memory_space<vmem>>) attributes {dimension_semantics = [#tpu.dimension_semantics<parallel>], iteration_bounds = array<i64: 1>, scalar_prefetch = 0 : i64, scratch_operands = 0 : i64, tpu.core_type = #tpu.core_type<tc>, window_params = [{transform_indices = @transform_0, window_bounds = array<i64: 128, 8>}, {pipeline_mode = #tpu.pipeline_mode<synchronous>, transform_indices = @transform_1, window_bounds = array<i64: 8, 36>}, {pipeline_mode = #tpu.pipeline_mode<synchronous>, transform_indices = @transform_2, window_bounds = array<i64: 1, 36>}, {transform_indices = @transform_3, window_bounds = array<i64: 128, 36>}]} {
    %c0 = arith.constant 0 : index
    %c0_0 = arith.constant 0 : index
    %0 = vector.load %arg1[%c0, %c0_0] : memref<128x8xbf16, #tpu.memory_space<vmem>>, vector<128x8xbf16>
    %c0_1 = arith.constant 0 : index
    %c0_2 = arith.constant 0 : index
    %1 = vector.load %arg2[%c0_1, %c0_2] : memref<8x36xbf16, #tpu.memory_space<vmem>>, vector<8x36xbf16>
    %cst = arith.constant dense<0.000000e+00> : vector<128x36xf32>
    %2 = tpu.matmul %0, %1, %cst {dimension_numbers = #tpu.dot_dimension_numbers<[1], [0], [0], [1], [0, 0, 1, 1], [], []>} : vector<128x8xbf16>, vector<8x36xbf16>, vector<128x36xf32> -> vector<128x36xf32>
    %c0_3 = arith.constant 0 : index
    %c0_4 = arith.constant 0 : index
    %3 = vector.load %arg3[%c0_3, %c0_4] : memref<1x36xf32, #tpu.memory_space<vmem>>, vector<1x36xf32>
    %4 = vector.broadcast %3 : vector<1x36xf32> to vector<128x36xf32>
    %5 = arith.addf %2, %4 : vector<128x36xf32>
    %c0_5 = arith.constant 0 : index
    %c0_6 = arith.constant 0 : index
    %6 = vector.load %arg4[%c0_5, %c0_6] : memref<128x36xf32, #tpu.memory_space<vmem>>, vector<128x36xf32>
    tpu.vector_store %arg4[%c0_5, %c0_6], %5 {strides = array<i32>} : memref<128x36xf32, #tpu.memory_space<vmem>>, vector<128x36xf32>,
    return
  }
  func.func @transform_0(%arg0: i32) -> (i32, i32) {
    %c0_i32 = arith.constant 0 : i32
    %c0_i32_0 = arith.constant 0 : i32
    return %arg0, %c0_i32 : i32, i32
  }
  func.func @transform_1(%arg0: i32) -> (i32, i32) {
    %c0_i32 = arith.constant 0 : i32
    %c0_i32_0 = arith.constant 0 : i32
    %c0_i32_1 = arith.constant 0 : i32
    return %c0_i32, %c0_i32_0 : i32, i32
  }
  func.func @transform_2(%arg0: i32) -> (i32, i32) {
    %c0_i32 = arith.constant 0 : i32
    %c0_i32_0 = arith.constant 0 : i32
    %c0_i32_1 = arith.constant 0 : i32
    return %c0_i32, %c0_i32_0 : i32, i32
  }
  func.func @transform_3(%arg0: i32) -> (i32, i32) {
    %c0_i32 = arith.constant 0 : i32
    %c0_i32_0 = arith.constant 0 : i32
    return %arg0, %c0_i32 : i32, i32
  }
}

module attributes {stable_mosaic.version = 11 : i64} {
  func.func @_relu_bn_kernel(%arg0: memref<512x4xf32, #tpu.memory_space<vmem>>, %arg1: memref<1x4xf32, #tpu.memory_space<vmem>>, %arg2: memref<1x4xf32, #tpu.memory_space<vmem>>, %arg3: memref<512x4xf32, #tpu.memory_space<vmem>>) attributes {dimension_semantics = [], scalar_prefetch = 0 : i64, scratch_operands = 0 : i64, tpu.core_type = #tpu.core_type<tc>} {
    %c0 = arith.constant 0 : index
    %c0_0 = arith.constant 0 : index
    %0 = vector.load %arg0[%c0, %c0_0] : memref<512x4xf32, #tpu.memory_space<vmem>>, vector<512x4xf32>
    %cst = arith.constant 0.000000e+00 : f32
    %1 = vector.broadcast %cst : f32 to vector<512x4xf32>
    %2 = arith.maximumf %0, %1 : vector<512x4xf32>
    %c0_1 = arith.constant 0 : index
    %c0_2 = arith.constant 0 : index
    %3 = vector.load %arg1[%c0_1, %c0_2] : memref<1x4xf32, #tpu.memory_space<vmem>>, vector<1x4xf32>
    %c0_3 = arith.constant 0 : index
    %c0_4 = arith.constant 0 : index
    %4 = vector.load %arg2[%c0_3, %c0_4] : memref<1x4xf32, #tpu.memory_space<vmem>>, vector<1x4xf32>
    %cst_5 = arith.constant dense<0.000000e+00> : vector<4xf32>
    %5 = vector.multi_reduction <add>, %2, %cst_5 [0] : vector<512x4xf32> to vector<4xf32>
    %6 = vector.shape_cast %5 : vector<4xf32> to vector<1x4xf32>
    %cst_6 = arith.constant 0.001953125 : f32
    %7 = vector.broadcast %cst_6 : f32 to vector<1x4xf32>
    %8 = arith.mulf %6, %7 : vector<1x4xf32>
    %9 = vector.broadcast %8 : vector<1x4xf32> to vector<512x4xf32>
    %10 = arith.subf %2, %9 : vector<512x4xf32>
    %11 = arith.mulf %10, %10 : vector<512x4xf32>
    %cst_7 = arith.constant dense<0.000000e+00> : vector<4xf32>
    %12 = vector.multi_reduction <add>, %11, %cst_7 [0] : vector<512x4xf32> to vector<4xf32>
    %13 = vector.shape_cast %12 : vector<4xf32> to vector<1x4xf32>
    %cst_8 = arith.constant 0.001953125 : f32
    %14 = vector.broadcast %cst_8 : f32 to vector<1x4xf32>
    %15 = arith.mulf %13, %14 : vector<1x4xf32>
    %cst_9 = arith.constant 9.99999974E-6 : f32
    %16 = vector.broadcast %cst_9 : f32 to vector<1x4xf32>
    %17 = arith.addf %15, %16 : vector<1x4xf32>
    %18 = math.rsqrt %17 : vector<1x4xf32>
    %19 = vector.broadcast %18 : vector<1x4xf32> to vector<512x4xf32>
    %20 = arith.mulf %10, %19 : vector<512x4xf32>
    %21 = vector.broadcast %3 : vector<1x4xf32> to vector<512x4xf32>
    %22 = arith.mulf %20, %21 : vector<512x4xf32>
    %23 = vector.broadcast %4 : vector<1x4xf32> to vector<512x4xf32>
    %24 = arith.addf %22, %23 : vector<512x4xf32>
    %c0_10 = arith.constant 0 : index
    %c0_11 = arith.constant 0 : index
    %25 = vector.load %arg3[%c0_10, %c0_11] : memref<512x4xf32, #tpu.memory_space<vmem>>, vector<512x4xf32>
    tpu.vector_store %arg3[%c0_10, %c0_11], %24 {strides = array<i32>} : memref<512x4xf32, #tpu.memory_space<vmem>>, vector<512x4xf32>,
    return
  }
}

module attributes {stable_mosaic.version = 11 : i64} {
  func.func @_head_kernel(%arg0: memref<2x16x16xf32, #tpu.memory_space<vmem>>, %arg1: memref<16x10xf32, #tpu.memory_space<vmem>>, %arg2: memref<1x10xf32, #tpu.memory_space<vmem>>, %arg3: memref<2x16xf32, #tpu.memory_space<vmem>>, %arg4: memref<2x10xf32, #tpu.memory_space<vmem>>) attributes {dimension_semantics = [], scalar_prefetch = 0 : i64, scratch_operands = 0 : i64, tpu.core_type = #tpu.core_type<tc>} {
    %c0 = arith.constant 0 : index
    %c0_0 = arith.constant 0 : index
    %c0_1 = arith.constant 0 : index
    %0 = vector.load %arg0[%c0, %c0_0, %c0_1] : memref<2x16x16xf32, #tpu.memory_space<vmem>>, vector<2x16x16xf32>
    %cst = arith.constant dense<0.000000e+00> : vector<2x16xf32>
    %1 = vector.multi_reduction <add>, %0, %cst [1] : vector<2x16x16xf32> to vector<2x16xf32>
    %cst_2 = arith.constant 6.250000e-02 : f32
    %2 = vector.broadcast %cst_2 : f32 to vector<2x16xf32>
    %3 = arith.mulf %1, %2 : vector<2x16xf32>
    %c0_3 = arith.constant 0 : index
    %c0_4 = arith.constant 0 : index
    %4 = vector.load %arg3[%c0_3, %c0_4] : memref<2x16xf32, #tpu.memory_space<vmem>>, vector<2x16xf32>
    tpu.vector_store %arg3[%c0_3, %c0_4], %3 {strides = array<i32>} : memref<2x16xf32, #tpu.memory_space<vmem>>, vector<2x16xf32>,
    %5 = vector.shape_cast %3 : vector<2x16xf32> to vector<2x16x1xf32>
    %c0_5 = arith.constant 0 : index
    %c0_6 = arith.constant 0 : index
    %6 = vector.load %arg1[%c0_5, %c0_6] : memref<16x10xf32, #tpu.memory_space<vmem>>, vector<16x10xf32>
    %7 = vector.shape_cast %6 : vector<16x10xf32> to vector<1x16x10xf32>
    %8 = vector.broadcast %5 : vector<2x16x1xf32> to vector<2x16x10xf32>
    %9 = vector.broadcast %7 : vector<1x16x10xf32> to vector<2x16x10xf32>
    %10 = arith.mulf %8, %9 : vector<2x16x10xf32>
    %cst_7 = arith.constant dense<0.000000e+00> : vector<2x10xf32>
    %11 = vector.multi_reduction <add>, %10, %cst_7 [1] : vector<2x16x10xf32> to vector<2x10xf32>
    %c0_8 = arith.constant 0 : index
    %c0_9 = arith.constant 0 : index
    %12 = vector.load %arg2[%c0_8, %c0_9] : memref<1x10xf32, #tpu.memory_space<vmem>>, vector<1x10xf32>
    %13 = vector.broadcast %12 : vector<1x10xf32> to vector<2x10xf32>
    %14 = arith.addf %11, %13 : vector<2x10xf32>
    %c0_10 = arith.constant 0 : index
    %c0_11 = arith.constant 0 : index
    %15 = vector.load %arg4[%c0_10, %c0_11] : memref<2x10xf32, #tpu.memory_space<vmem>>, vector<2x10xf32>
    tpu.vector_store %arg4[%c0_10, %c0_11], %14 {strides = array<i32>} : memref<2x10xf32, #tpu.memory_space<vmem>>, vector<2x10xf32>,
    return
  }
}

</mosaic_0001>

<llo_original>
// kernel: _lambda_.10
$region0: #{_lambda_.10}
  #allocation0 [shape = 'u32[]', space=smem, size = 0x4, offset = 0x4, fixed_abs, tag = 'smem constant byte address 0x4 - core index']
  #allocation1 [shape = 'u32[72,128]{1,0:T(1,128)}', space=vmem, size = 0x9000, scoped, tag = 'internal scratch']
  %s0 = inlined_call_operand.vmem [shape: f32[128,8], index: 0, kind: input, shape index: {}]
  %s1 = inlined_call_operand.vmem [shape: f32[1,8], index: 1, kind: input, shape index: {}]
  %s2 = inlined_call_operand.vmem [shape: f32[1,8], index: 2, kind: input, shape index: {}]
  %s3 = inlined_call_operand.vmem [shape: f32[128,8], index: 3, kind: output, shape index: {}]
  %s4 = sld [smem:[#allocation0]]
  $region22: #{_lambda_.10} parent=0
    _
  %s6 = ssub.s32 1, %s4
  %s7 = scalar_select 0, %s6, %s4
  // Predicated region
  $region2: #{_lambda_.10} parent=0 // pred_check
    _
  $region3: #{_lambda_.10} parent=0 // pred_check_branch
    %9 = sbr.rel (0) target = $region5
  $region4: #{_lambda_.10} parent=0 // pred_region
    _
  $region5: #{_lambda_.10} parent=0 // pred_fallthru
    _
  // Predicated region
  $region6: #{_lambda_.10} parent=0 // pred_check
    _
  $region7: #{_lambda_.10} parent=0 // pred_check_branch
    %11 = sbr.rel (0) target = $region9
  $region8: #{_lambda_.10} parent=0 // pred_region
    _
  $region9: #{_lambda_.10} parent=0 // pred_fallthru
    _
  // Predicated region
  $region10: #{_lambda_.10} parent=0 // pred_check
    _
  $region11: #{_lambda_.10} parent=0 // pred_check_branch
    %13 = sbr.rel (0) target = $region13
  $region12: #{_lambda_.10} parent=0 // pred_region
    _
  $region13: #{_lambda_.10} parent=0 // pred_fallthru
    _
  %v14 = vld [vmem:[%s0] sm:$0xff]
  %v15 = vld [vmem:[%s0 + $0x8] sm:$0xff]
  %v16 = vld [vmem:[%s0 + $0x10] sm:$0xff]
  %v17 = vld [vmem:[%s0 + $0x18] sm:$0xff]
  %v18 = vld [vmem:[%s0 + $0x20] sm:$0xff]
  %v19 = vld [vmem:[%s0 + $0x28] sm:$0xff]
  %v20 = vld [vmem:[%s0 + $0x30] sm:$0xff]
  %v21 = vld [vmem:[%s0 + $0x38] sm:$0xff]
  %v22 = vld [vmem:[%s0 + $0x40] sm:$0xff]
  %v23 = vld [vmem:[%s0 + $0x48] sm:$0xff]
  %v24 = vld [vmem:[%s0 + $0x50] sm:$0xff]
  %v25 = vld [vmem:[%s0 + $0x58] sm:$0xff]
  %v26 = vld [vmem:[%s0 + $0x60] sm:$0xff]
  %v27 = vld [vmem:[%s0 + $0x68] sm:$0xff]
  %v28 = vld [vmem:[%s0 + $0x70] sm:$0xff]
  %v29 = vld [vmem:[%s0 + $0x78] sm:$0xff]
  %v30 = vmax.f32 %v14, 0.0
  %v31 = vmax.f32 %v15, 0.0
  %v32 = vmax.f32 %v16, 0.0
  %v33 = vmax.f32 %v17, 0.0
  %v34 = vmax.f32 %v18, 0.0
  %v35 = vmax.f32 %v19, 0.0
  %v36 = vmax.f32 %v20, 0.0
  %v37 = vmax.f32 %v21, 0.0
  %v38 = vmax.f32 %v22, 0.0
  %v39 = vmax.f32 %v23, 0.0
  %v40 = vmax.f32 %v24, 0.0
  %v41 = vmax.f32 %v25, 0.0
  %v42 = vmax.f32 %v26, 0.0
  %v43 = vmax.f32 %v27, 0.0
  %v44 = vmax.f32 %v28, 0.0
  %v45 = vmax.f32 %v29, 0.0
  %v46 = vld [vmem:[%s1] sm:$0x1]
  %v47 = vld [vmem:[%s2] sm:$0x1]
  %vm48 = vcmask 64512
  %v49 = vsel %vm48, %v30, 0.0
  %v50 = vsel %vm48, %v31, 0.0
  %v51 = vadd.f32 %v49, %v50
  %v52 = vsel %vm48, %v32, 0.0
  %v53 = vadd.f32 %v51, %v52
  %v54 = vsel %vm48, %v33, 0.0
  %v55 = vadd.f32 %v53, %v54
  %v56 = vsel %vm48, %v34, 0.0
  %v57 = vadd.f32 %v55, %v56
  %v58 = vsel %vm48, %v35, 0.0
  %v59 = vadd.f32 %v57, %v58
  %v60 = vsel %vm48, %v36, 0.0
  %v61 = vadd.f32 %v59, %v60
  %v62 = vsel %vm48, %v37, 0.0
  %v63 = vadd.f32 %v61, %v62
  %v64 = vsel %vm48, %v38, 0.0
  %v65 = vadd.f32 %v63, %v64
  %v66 = vsel %vm48, %v39, 0.0
  %v67 = vadd.f32 %v65, %v66
  %v68 = vsel %vm48, %v40, 0.0
  %v69 = vadd.f32 %v67, %v68
  %v70 = vsel %vm48, %v41, 0.0
  %v71 = vadd.f32 %v69, %v70
  %v72 = vsel %vm48, %v42, 0.0
  %v73 = vadd.f32 %v71, %v72
  %v74 = vsel %vm48, %v43, 0.0
  %v75 = vadd.f32 %v73, %v74
  %v76 = vsel %vm48, %v44, 0.0
  %v77 = vadd.f32 %v75, %v76
  %v78 = vsel %vm48, %v45, 0.0
  %v79 = vadd.f32 %v77, %v78
  %v80 = vrot.slane %v79, 4
  %v81 = vadd.f32 %v79, %v80
  %v82 = vrot.slane %v81, 2
  %v83 = vadd.f32 %v81, %v82
  %v84 = vrot.slane %v83, 1
  %v85 = vadd.f32 %v83, %v84
  %v86 = vmul.f32 %v85, 0.0078125
  %v87 = vsub.f32 %v30, %v86
  %v88 = vsub.f32 %v31, %v86
  %v89 = vsub.f32 %v32, %v86
  %v90 = vsub.f32 %v33, %v86
  %v91 = vsub.f32 %v34, %v86
  %v92 = vsub.f32 %v35, %v86
  %v93 = vsub.f32 %v36, %v86
  %v94 = vsub.f32 %v37, %v86
  %v95 = vsub.f32 %v38, %v86
  %v96 = vsub.f32 %v39, %v86
  %v97 = vsub.f32 %v40, %v86
  %v98 = vsub.f32 %v41, %v86
  %v99 = vsub.f32 %v42, %v86
  %v100 = vsub.f32 %v43, %v86
  %v101 = vsub.f32 %v44, %v86
  %v102 = vsub.f32 %v45, %v86
  %v103 = vmul.f32 %v87, %v87
  %v104 = vmul.f32 %v88, %v88
  %v105 = vmul.f32 %v89, %v89
  %v106 = vmul.f32 %v90, %v90
  %v107 = vmul.f32 %v91, %v91
  %v108 = vmul.f32 %v92, %v92
  %v109 = vmul.f32 %v93, %v93
  %v110 = vmul.f32 %v94, %v94
  %v111 = vmul.f32 %v95, %v95
  %v112 = vmul.f32 %v96, %v96
  %v113 = vmul.f32 %v97, %v97
  %v114 = vmul.f32 %v98, %v98
  %v115 = vmul.f32 %v99, %v99
  %v116 = vmul.f32 %v100, %v100
  %v117 = vmul.f32 %v101, %v101
  %v118 = vmul.f32 %v102, %v102
  %v119 = vsel %vm48, %v103, 0.0
  %v120 = vsel %vm48, %v104, 0.0
  %v121 = vadd.f32 %v119, %v120
  %v122 = vsel %vm48, %v105, 0.0
  %v123 = vadd.f32 %v121, %v122
  %v124 = vsel %vm48, %v106, 0.0
  %v125 = vadd.f32 %v123, %v124
  %v126 = vsel %vm48, %v107, 0.0
  %v127 = vadd.f32 %v125, %v126
  %v128 = vsel %vm48, %v108, 0.0
  %v129 = vadd.f32 %v127, %v128
  %v130 = vsel %vm48, %v109, 0.0
  %v131 = vadd.f32 %v129, %v130
  %v132 = vsel %vm48, %v110, 0.0
  %v133 = vadd.f32 %v131, %v132
  %v134 = vsel %vm48, %v111, 0.0
  %v135 = vadd.f32 %v133, %v134
  %v136 = vsel %vm48, %v112, 0.0
  %v137 = vadd.f32 %v135, %v136
  %v138 = vsel %vm48, %v113, 0.0
  %v139 = vadd.f32 %v137, %v138
  %v140 = vsel %vm48, %v114, 0.0
  %v141 = vadd.f32 %v139, %v140
  %v142 = vsel %vm48, %v115, 0.0
  %v143 = vadd.f32 %v141, %v142
  %v144 = vsel %vm48, %v116, 0.0
  %v145 = vadd.f32 %v143, %v144
  %v146 = vsel %vm48, %v117, 0.0
  %v147 = vadd.f32 %v145, %v146
  %v148 = vsel %vm48, %v118, 0.0
  %v149 = vadd.f32 %v147, %v148
  %v150 = vrot.slane %v149, 4
  %v151 = vadd.f32 %v149, %v150
  %v152 = vrot.slane %v151, 2
  %v153 = vadd.f32 %v151, %v152
  %v154 = vrot.slane %v153, 1
  %v155 = vadd.f32 %v153, %v154
  %v156 = vmul.f32 %v155, 0.0078125
  %v157 = vadd.f32 %v156, 1e-05
  %v158 = vrsqrt.pop %v157
  %v159 = vmul.f32 %v158, %v157
  %v160 = vmul.f32 %v159, %v158
  %v161 = vmul.f32 0.5, %v160
  %v162 = vsub.f32 1.5, %v161
  %v163 = vmul.f32 %v158, %v162
  %vm164 = vweird.f32 %v157
  %vm165 = vweird.f32 %v158
  %vm166 = vmor %vm164, %vm165
  %v167 = vsel %vm166, %v158, %v163
  %v168 = vmul.f32 %v87, %v167
  %v169 = vmul.f32 %v88, %v167
  %v170 = vmul.f32 %v89, %v167
  %v171 = vmul.f32 %v90, %v167
  %v172 = vmul.f32 %v91, %v167
  %v173 = vmul.f32 %v92, %v167
  %v174 = vmul.f32 %v93, %v167
  %v175 = vmul.f32 %v94, %v167
  %v176 = vmul.f32 %v95, %v167
  %v177 = vmul.f32 %v96, %v167
  %v178 = vmul.f32 %v97, %v167
  %v179 = vmul.f32 %v98, %v167
  %v180 = vmul.f32 %v99, %v167
  %v181 = vmul.f32 %v100, %v167
  %v182 = vmul.f32 %v101, %v167
  %v183 = vmul.f32 %v102, %v167
  %v185 = vperm.slane %v46, 0
  %v187 = vmul.f32 %v168, %v185
  %v188 = vmul.f32 %v169, %v185
  %v189 = vmul.f32 %v170, %v185
  %v190 = vmul.f32 %v171, %v185
  %v191 = vmul.f32 %v172, %v185
  %v192 = vmul.f32 %v173, %v185
  %v193 = vmul.f32 %v174, %v185
  %v194 = vmul.f32 %v175, %v185
  %v195 = vmul.f32 %v176, %v185
  %v196 = vmul.f32 %v177, %v185
  %v197 = vmul.f32 %v178, %v185
  %v198 = vmul.f32 %v179, %v185
  %v199 = vmul.f32 %v180, %v185
  %v200 = vmul.f32 %v181, %v185
  %v201 = vmul.f32 %v182, %v185
  %v202 = vmul.f32 %v183, %v185
  %v204 = vperm.slane %v47, 0
  %v206 = vadd.f32 %v187, %v204
  %v207 = vadd.f32 %v188, %v204
  %v208 = vadd.f32 %v189, %v204
  %v209 = vadd.f32 %v190, %v204
  %v210 = vadd.f32 %v191, %v204
  %v211 = vadd.f32 %v192, %v204
  %v212 = vadd.f32 %v193, %v204
  %v213 = vadd.f32 %v194, %v204
  %v214 = vadd.f32 %v195, %v204
  %v215 = vadd.f32 %v196, %v204
  %v216 = vadd.f32 %v197, %v204
  %v217 = vadd.f32 %v198, %v204
  %v218 = vadd.f32 %v199, %v204
  %v219 = vadd.f32 %v200, %v204
  %v220 = vadd.f32 %v201, %v204
  %v221 = vadd.f32 %v202, %v204
  %222 = vst.msk [vmem:[%s3] sm:$0xff] %vm48, %v206
  %223 = vst.msk [vmem:[%s3 + $0x8] sm:$0xff] %vm48, %v207
  %224 = vst.msk [vmem:[%s3 + $0x10] sm:$0xff] %vm48, %v208
  %225 = vst.msk [vmem:[%s3 + $0x18] sm:$0xff] %vm48, %v209
  %226 = vst.msk [vmem:[%s3 + $0x20] sm:$0xff] %vm48, %v210
  %227 = vst.msk [vmem:[%s3 + $0x28] sm:$0xff] %vm48, %v211
  %228 = vst.msk [vmem:[%s3 + $0x30] sm:$0xff] %vm48, %v212
  %229 = vst.msk [vmem:[%s3 + $0x38] sm:$0xff] %vm48, %v213
  %230 = vst.msk [vmem:[%s3 + $0x40] sm:$0xff] %vm48, %v214
  %231 = vst.msk [vmem:[%s3 + $0x48] sm:$0xff] %vm48, %v215
  %232 = vst.msk [vmem:[%s3 + $0x50] sm:$0xff] %vm48, %v216
  %233 = vst.msk [vmem:[%s3 + $0x58] sm:$0xff] %vm48, %v217
  %234 = vst.msk [vmem:[%s3 + $0x60] sm:$0xff] %vm48, %v218
  %235 = vst.msk [vmem:[%s3 + $0x68] sm:$0xff] %vm48, %v219
  %236 = vst.msk [vmem:[%s3 + $0x70] sm:$0xff] %vm48, %v220
  %237 = vst.msk [vmem:[%s3 + $0x78] sm:$0xff] %vm48, %v221
  // Predicated region
  $region14: #{_lambda_.10} parent=0 // pred_check
    _
  $region15: #{_lambda_.10} parent=0 // pred_check_branch
    %239 = sbr.rel (0) target = $region17
  $region16: #{_lambda_.10} parent=0 // pred_region
    _
  $region17: #{_lambda_.10} parent=0 // pred_fallthru
    _
  // Predicated region
  $region18: #{_lambda_.10} parent=0 // pred_check
    _
  $region19: #{_lambda_.10} parent=0 // pred_check_branch
    %241 = sbr.rel (0) target = $region21
  $region20: #{_lambda_.10} parent=0 // pred_region
    _
  $region21: #{_lambda_.10} parent=0 // pred_fallthru
    _

// kernel: _lambda_.9
$region0: #{_lambda_.9}
  #allocation0 [shape = 'u32[]', space=smem, size = 0x4, offset = 0x4, fixed_abs, tag = 'smem constant byte address 0x4 - core index']
  #allocation1 [shape = 'u32[72,128]{1,0:T(1,128)}', space=vmem, size = 0x9000, scoped, tag = 'internal scratch']
  %s0 = inlined_call_operand.vmem [shape: bf16[128,36], index: 0, kind: input, shape index: {}]
  %s1 = inlined_call_operand.vmem [shape: bf16[36,8], index: 1, kind: input, shape index: {}]
  %s2 = inlined_call_operand.vmem [shape: f32[1,8], index: 2, kind: input, shape index: {}]
  %s3 = inlined_call_operand.vmem [shape: f32[128,8], index: 3, kind: output, shape index: {}]
  %s4 = sld [smem:[#allocation0]]
  $region22: #{_lambda_.9} parent=0
    _
  %s6 = ssub.s32 1, %s4
  %s7 = scalar_select 0, %s6, %s4
  // Predicated region
  $region2: #{_lambda_.9} parent=0 // pred_check
    _
  $region3: #{_lambda_.9} parent=0 // pred_check_branch
    %9 = sbr.rel (0) target = $region5
  $region4: #{_lambda_.9} parent=0 // pred_region
    _
  $region5: #{_lambda_.9} parent=0 // pred_fallthru
    _
  // Predicated region
  $region6: #{_lambda_.9} parent=0 // pred_check
    _
  $region7: #{_lambda_.9} parent=0 // pred_check_branch
    %11 = sbr.rel (0) target = $region9
  $region8: #{_lambda_.9} parent=0 // pred_region
    _
  $region9: #{_lambda_.9} parent=0 // pred_fallthru
    _
  // Predicated region
  $region10: #{_lambda_.9} parent=0 // pred_check
    _
  $region11: #{_lambda_.9} parent=0 // pred_check_branch
    %13 = sbr.rel (0) target = $region13
  $region12: #{_lambda_.9} parent=0 // pred_region
    _
  $region13: #{_lambda_.9} parent=0 // pred_fallthru
    _
  %v15 = vld [vmem:[%s0] sm:$0xf]
  %v16 = vld [vmem:[%s0 + $0x4] sm:$0xf]
  %v17 = vld [vmem:[%s0 + $0x8] sm:$0xf]
  %v18 = vld [vmem:[%s0 + $0xc] sm:$0xf]
  %v19 = vld [vmem:[%s0 + $0x10] sm:$0xf]
  %v20 = vld [vmem:[%s0 + $0x14] sm:$0xf]
  %v21 = vld [vmem:[%s0 + $0x18] sm:$0xf]
  %v22 = vld [vmem:[%s0 + $0x1c] sm:$0xf]
  %v23 = vld [vmem:[%s0 + $0x20] sm:$0xf]
  %v24 = vld [vmem:[%s0 + $0x24] sm:$0xf]
  %v25 = vld [vmem:[%s0 + $0x28] sm:$0xf]
  %v26 = vld [vmem:[%s0 + $0x2c] sm:$0xf]
  %v27 = vld [vmem:[%s0 + $0x30] sm:$0xf]
  %v28 = vld [vmem:[%s0 + $0x34] sm:$0xf]
  %v29 = vld [vmem:[%s0 + $0x38] sm:$0xf]
  %v30 = vld [vmem:[%s0 + $0x3c] sm:$0xf]
  %v31 = vld [vmem:[%s1] sm:$0xf]
  %v32 = vld [vmem:[%s1 + $0x4] sm:$0xf]
  %v33 = vld [vmem:[%s1 + $0x8] sm:$0xf]
  %v34 = vld [vmem:[%s1 + $0xc] sm:$0xf]
  %v35 = vld [vmem:[%s1 + $0x10] sm:$0x3]
  %v36 = vld [vmem:[%s2] sm:$0x1]
  %v38 = vperm.slane %v36, 0
  %v56 = vunpack.c.l.b16 %v15
  %v57 = vunpack.c.l.b16 %v16
  %v58 = vunpack.c.l.b16 %v17
  %v59 = vunpack.c.l.b16 %v18
  %v60 = vunpack.c.l.b16 %v19
  %v61 = vunpack.c.l.b16 %v20
  %v62 = vunpack.c.l.b16 %v21
  %v63 = vunpack.c.l.b16 %v22
  %v64 = vunpack.c.l.b16 %v23
  %v65 = vunpack.c.l.b16 %v24
  %v66 = vunpack.c.l.b16 %v25
  %v67 = vunpack.c.l.b16 %v26
  %v68 = vunpack.c.l.b16 %v27
  %v69 = vunpack.c.l.b16 %v28
  %v70 = vunpack.c.l.b16 %v29
  %v71 = vunpack.c.l.b16 %v30
  %v72 = vpack.c.b16 %v57, %v56
  %v73 = vpack.c.b16 %v59, %v58
  %v74 = vpack.c.b16 %v61, %v60
  %v75 = vpack.c.b16 %v63, %v62
  %v76 = vpack.c.b16 %v65, %v64
  %v77 = vpack.c.b16 %v67, %v66
  %v78 = vpack.c.b16 %v69, %v68
  %v79 = vpack.c.b16 %v71, %v70
  %v85 = vunpack.c.l.b16 %v31
  %v86 = vunpack.c.l.b16 %v32
  %v87 = vunpack.c.l.b16 %v33
  %v88 = vunpack.c.l.b16 %v34
  %v89 = vunpack.c.l.b16 %v35
  %v90 = vpack.c.b16 %v86, %v85
  %v91 = vpack.c.b16 %v88, %v87
  %v92 = vpack.c.b16 %v89, %v89
  %vm95 = vcmask 293888
  %v97 = vsel %vm95, %v72, 0
  %v100 = vsel %vm95, %v73, 0
  %v103 = vsel %vm95, %v74, 0
  %v106 = vsel %vm95, %v75, 0
  %v109 = vsel %vm95, %v76, 0
  %v112 = vsel %vm95, %v77, 0
  %v115 = vsel %vm95, %v78, 0
  %v118 = vsel %vm95, %v79, 0
  %vm120 = vcmask 1041408
  %v122 = vsel %vm120, %v92, 0
  %124 = vmatpush.bf16.msra.mxu0 0
  %125 = vmatpush.bf16.msra.mxu0 0
  %126 = vmatpush.bf16.msra.mxu0 0
  %127 = vmatpush.bf16.msra.mxu0 0
  %128 = vmatpush.bf16.msra.mxu0 0
  %129 = vmatpush.bf16.msra.mxu0 %v122
  %130 = vmatpush.bf16.msra.mxu0 %v91
  %131 = vmatpush.bf16.msra.mxu0 %v90
  %132 = vmatmul.bf16.gmra.mxu0 %v97
  %v133 = vpop.f32.mrf.mxu0
  %v134 = vadd.f32 %v38, %v133
  %v135 = vpop.f32.mrf.mxu0
  %v136 = vadd.f32 %v38, %v135
  %137 = vmatmul.bf16.gmra.mxu0 %v100
  %v138 = vpop.f32.mrf.mxu0
  %v139 = vadd.f32 %v38, %v138
  %v140 = vpop.f32.mrf.mxu0
  %v141 = vadd.f32 %v38, %v140
  %142 = vmatmul.bf16.gmra.mxu0 %v103
  %v143 = vpop.f32.mrf.mxu0
  %v144 = vadd.f32 %v38, %v143
  %v145 = vpop.f32.mrf.mxu0
  %v146 = vadd.f32 %v38, %v145
  %147 = vmatmul.bf16.gmra.mxu0 %v106
  %v148 = vpop.f32.mrf.mxu0
  %v149 = vadd.f32 %v38, %v148
  %v150 = vpop.f32.mrf.mxu0
  %v151 = vadd.f32 %v38, %v150
  %152 = vmatmul.bf16.gmra.mxu0 %v109
  %v153 = vpop.f32.mrf.mxu0
  %v154 = vadd.f32 %v38, %v153
  %v155 = vpop.f32.mrf.mxu0
  %v156 = vadd.f32 %v38, %v155
  %157 = vmatmul.bf16.gmra.mxu0 %v112
  %v158 = vpop.f32.mrf.mxu0
  %v159 = vadd.f32 %v38, %v158
  %v160 = vpop.f32.mrf.mxu0
  %v161 = vadd.f32 %v38, %v160
  %162 = vmatmul.bf16.gmra.mxu0 %v115
  %v163 = vpop.f32.mrf.mxu0
  %v164 = vadd.f32 %v38, %v163
  %v165 = vpop.f32.mrf.mxu0
  %v166 = vadd.f32 %v38, %v165
  %167 = vmatmul.bf16.gmra.mxu0 %v118
  %v168 = vpop.f32.mrf.mxu0
  %v169 = vadd.f32 %v38, %v168
  %v170 = vpop.f32.mrf.mxu0
  %v171 = vadd.f32 %v38, %v170
  %172 = vdwg.mxu0
  %vm173 = vcmask 64512
  %174 = vst.msk [vmem:[%s3] sm:$0xff] %vm173, %v134
  %175 = vst.msk [vmem:[%s3 + $0x8] sm:$0xff] %vm173, %v136
  %176 = vst.msk [vmem:[%s3 + $0x10] sm:$0xff] %vm173, %v139
  %177 = vst.msk [vmem:[%s3 + $0x18] sm:$0xff] %vm173, %v141
  %178 = vst.msk [vmem:[%s3 + $0x20] sm:$0xff] %vm173, %v144
  %179 = vst.msk [vmem:[%s3 + $0x28] sm:$0xff] %vm173, %v146
  %180 = vst.msk [vmem:[%s3 + $0x30] sm:$0xff] %vm173, %v149
  %181 = vst.msk [vmem:[%s3 + $0x38] sm:$0xff] %vm173, %v151
  %182 = vst.msk [vmem:[%s3 + $0x40] sm:$0xff] %vm173, %v154
  %183 = vst.msk [vmem:[%s3 + $0x48] sm:$0xff] %vm173, %v156
  %184 = vst.msk [vmem:[%s3 + $0x50] sm:$0xff] %vm173, %v159
  %185 = vst.msk [vmem:[%s3 + $0x58] sm:$0xff] %vm173, %v161
  %186 = vst.msk [vmem:[%s3 + $0x60] sm:$0xff] %vm173, %v164
  %187 = vst.msk [vmem:[%s3 + $0x68] sm:$0xff] %vm173, %v166
  %188 = vst.msk [vmem:[%s3 + $0x70] sm:$0xff] %vm173, %v169
  %189 = vst.msk [vmem:[%s3 + $0x78] sm:$0xff] %vm173, %v171
  // Predicated region
  $region14: #{_lambda_.9} parent=0 // pred_check
    _
  $region15: #{_lambda_.9} parent=0 // pred_check_branch
    %191 = sbr.rel (0) target = $region17
  $region16: #{_lambda_.9} parent=0 // pred_region
    _
  $region17: #{_lambda_.9} parent=0 // pred_fallthru
    _
  // Predicated region
  $region18: #{_lambda_.9} parent=0 // pred_check
    _
  $region19: #{_lambda_.9} parent=0 // pred_check_branch
    %193 = sbr.rel (0) target = $region21
  $region20: #{_lambda_.9} parent=0 // pred_region
    _
  $region21: #{_lambda_.9} parent=0 // pred_fallthru
    _

// kernel: _lambda_.11
$region0: #{_lambda_.11}
  #allocation0 [shape = 'u32[]', space=smem, size = 0x4, offset = 0x4, fixed_abs, tag = 'smem constant byte address 0x4 - core index']
  #allocation1 [shape = 'u32[72,128]{1,0:T(1,128)}', space=vmem, size = 0x9000, scoped, tag = 'internal scratch']
  %s0 = inlined_call_operand.vmem [shape: bf16[32,72], index: 0, kind: input, shape index: {}]
  %s1 = inlined_call_operand.vmem [shape: bf16[72,16], index: 1, kind: input, shape index: {}]
  %s2 = inlined_call_operand.vmem [shape: f32[1,16], index: 2, kind: input, shape index: {}]
  %s3 = inlined_call_operand.vmem [shape: f32[32,16], index: 3, kind: output, shape index: {}]
  %s4 = sld [smem:[#allocation0]]
  $region22: #{_lambda_.11} parent=0
    _
  %s6 = ssub.s32 1, %s4
  %s7 = scalar_select 0, %s6, %s4
  // Predicated region
  $region2: #{_lambda_.11} parent=0 // pred_check
    _
  $region3: #{_lambda_.11} parent=0 // pred_check_branch
    %9 = sbr.rel (0) target = $region5
  $region4: #{_lambda_.11} parent=0 // pred_region
    _
  $region5: #{_lambda_.11} parent=0 // pred_fallthru
    _
  // Predicated region
  $region6: #{_lambda_.11} parent=0 // pred_check
    _
  $region7: #{_lambda_.11} parent=0 // pred_check_branch
    %11 = sbr.rel (0) target = $region9
  $region8: #{_lambda_.11} parent=0 // pred_region
    _
  $region9: #{_lambda_.11} parent=0 // pred_fallthru
    _
  // Predicated region
  $region10: #{_lambda_.11} parent=0 // pred_check
    _
  $region11: #{_lambda_.11} parent=0 // pred_check_branch
    %13 = sbr.rel (0) target = $region13
  $region12: #{_lambda_.11} parent=0 // pred_region
    _
  $region13: #{_lambda_.11} parent=0 // pred_fallthru
    _
  %v15 = vld [vmem:[%s0] sm:$0xf]
  %v16 = vld [vmem:[%s0 + $0x4] sm:$0xf]
  %v17 = vld [vmem:[%s0 + $0x8] sm:$0xf]
  %v18 = vld [vmem:[%s0 + $0xc] sm:$0xf]
  %v19 = vld [vmem:[%s1] sm:$0xf]
  %v20 = vld [vmem:[%s1 + $0x4] sm:$0xf]
  %v21 = vld [vmem:[%s1 + $0x8] sm:$0xf]
  %v22 = vld [vmem:[%s1 + $0xc] sm:$0xf]
  %v23 = vld [vmem:[%s1 + $0x10] sm:$0xf]
  %v24 = vld [vmem:[%s1 + $0x14] sm:$0xf]
  %v25 = vld [vmem:[%s1 + $0x18] sm:$0xf]
  %v26 = vld [vmem:[%s1 + $0x1c] sm:$0xf]
  %v27 = vld [vmem:[%s1 + $0x20] sm:$0xf]
  %v28 = vld [vmem:[%s2] sm:$0x1]
  %v30 = vperm.slane %v28, 0
  %v36 = vunpack.c.l.b16 %v15
  %v37 = vunpack.c.l.b16 %v16
  %v38 = vunpack.c.l.b16 %v17
  %v39 = vunpack.c.l.b16 %v18
  %v40 = vpack.c.b16 %v37, %v36
  %v41 = vpack.c.b16 %v39, %v38
  %v51 = vunpack.c.l.b16 %v19
  %v52 = vunpack.c.l.b16 %v20
  %v53 = vunpack.c.l.b16 %v21
  %v54 = vunpack.c.l.b16 %v22
  %v55 = vunpack.c.l.b16 %v23
  %v56 = vunpack.c.l.b16 %v24
  %v57 = vunpack.c.l.b16 %v25
  %v58 = vunpack.c.l.b16 %v26
  %v59 = vunpack.c.l.b16 %v27
  %v60 = vpack.c.b16 %v52, %v51
  %v61 = vpack.c.b16 %v54, %v53
  %v62 = vpack.c.b16 %v56, %v55
  %v63 = vpack.c.b16 %v58, %v57
  %v64 = vpack.c.b16 %v59, %v59
  %vm69 = vcmask 588800
  %v71 = vsel %vm69, %v40, 0
  %v74 = vsel %vm69, %v41, 0
  %vm76 = vcmask 1043456
  %v78 = vsel %vm76, %v64, 0
  %80 = vmatpush.bf16.msra.mxu0 0
  %81 = vmatpush.bf16.msra.mxu0 0
  %82 = vmatpush.bf16.msra.mxu0 0
  %83 = vmatpush.bf16.msra.mxu0 %v78
  %84 = vmatpush.bf16.msra.mxu0 %v63
  %85 = vmatpush.bf16.msra.mxu0 %v62
  %86 = vmatpush.bf16.msra.mxu0 %v61
  %87 = vmatpush.bf16.msra.mxu0 %v60
  %88 = vmatmul.bf16.gmra.mxu0 %v71
  %v89 = vpop.f32.mrf.mxu0
  %v90 = vadd.f32 %v30, %v89
  %v91 = vpop.f32.mrf.mxu0
  %v92 = vadd.f32 %v30, %v91
  %93 = vmatmul.bf16.gmra.mxu0 %v74
  %v94 = vpop.f32.mrf.mxu0
  %v95 = vadd.f32 %v30, %v94
  %v96 = vpop.f32.mrf.mxu0
  %v97 = vadd.f32 %v30, %v96
  %98 = vdwg.mxu0
  %vm99 = vcmask 130048
  %100 = vst.msk [vmem:[%s3] sm:$0xff] %vm99, %v90
  %101 = vst.msk [vmem:[%s3 + $0x8] sm:$0xff] %vm99, %v92
  %102 = vst.msk [vmem:[%s3 + $0x10] sm:$0xff] %vm99, %v95
  %103 = vst.msk [vmem:[%s3 + $0x18] sm:$0xff] %vm99, %v97
  // Predicated region
  $region14: #{_lambda_.11} parent=0 // pred_check
    _
  $region15: #{_lambda_.11} parent=0 // pred_check_branch
    %105 = sbr.rel (0) target = $region17
  $region16: #{_lambda_.11} parent=0 // pred_region
    _
  $region17: #{_lambda_.11} parent=0 // pred_fallthru
    _
  // Predicated region
  $region18: #{_lambda_.11} parent=0 // pred_check
    _
  $region19: #{_lambda_.11} parent=0 // pred_check_branch
    %107 = sbr.rel (0) target = $region21
  $region20: #{_lambda_.11} parent=0 // pred_region
    _
  $region21: #{_lambda_.11} parent=0 // pred_fallthru
    _

// kernel: _lambda_.12
$region0: #{_lambda_.12}
  #allocation0 [shape = 'u32[]', space=smem, size = 0x4, offset = 0x4, fixed_abs, tag = 'smem constant byte address 0x4 - core index']
  #allocation1 [shape = 'u32[72,128]{1,0:T(1,128)}', space=vmem, size = 0x9000, scoped, tag = 'internal scratch']
  %s0 = inlined_call_operand.vmem [shape: f32[32,16], index: 0, kind: input, shape index: {}]
  %s1 = inlined_call_operand.vmem [shape: f32[1,16], index: 1, kind: input, shape index: {}]
  %s2 = inlined_call_operand.vmem [shape: f32[1,16], index: 2, kind: input, shape index: {}]
  %s3 = inlined_call_operand.vmem [shape: f32[32,16], index: 3, kind: output, shape index: {}]
  %s4 = sld [smem:[#allocation0]]
  $region22: #{_lambda_.12} parent=0
    _
  %s6 = ssub.s32 1, %s4
  %s7 = scalar_select 0, %s6, %s4
  // Predicated region
  $region2: #{_lambda_.12} parent=0 // pred_check
    _
  $region3: #{_lambda_.12} parent=0 // pred_check_branch
    %9 = sbr.rel (0) target = $region5
  $region4: #{_lambda_.12} parent=0 // pred_region
    _
  $region5: #{_lambda_.12} parent=0 // pred_fallthru
    _
  // Predicated region
  $region6: #{_lambda_.12} parent=0 // pred_check
    _
  $region7: #{_lambda_.12} parent=0 // pred_check_branch
    %11 = sbr.rel (0) target = $region9
  $region8: #{_lambda_.12} parent=0 // pred_region
    _
  $region9: #{_lambda_.12} parent=0 // pred_fallthru
    _
  // Predicated region
  $region10: #{_lambda_.12} parent=0 // pred_check
    _
  $region11: #{_lambda_.12} parent=0 // pred_check_branch
    %13 = sbr.rel (0) target = $region13
  $region12: #{_lambda_.12} parent=0 // pred_region
    _
  $region13: #{_lambda_.12} parent=0 // pred_fallthru
    _
  %v14 = vld [vmem:[%s0] sm:$0xff]
  %v15 = vld [vmem:[%s0 + $0x8] sm:$0xff]
  %v16 = vld [vmem:[%s0 + $0x10] sm:$0xff]
  %v17 = vld [vmem:[%s0 + $0x18] sm:$0xff]
  %v18 = vmax.f32 %v14, 0.0
  %v19 = vmax.f32 %v15, 0.0
  %v20 = vmax.f32 %v16, 0.0
  %v21 = vmax.f32 %v17, 0.0
  %v22 = vld [vmem:[%s1] sm:$0x1]
  %v23 = vld [vmem:[%s2] sm:$0x1]
  %vm24 = vcmask 130048
  %v25 = vsel %vm24, %v18, 0.0
  %v26 = vsel %vm24, %v19, 0.0
  %v27 = vadd.f32 %v25, %v26
  %v28 = vsel %vm24, %v20, 0.0
  %v29 = vadd.f32 %v27, %v28
  %v30 = vsel %vm24, %v21, 0.0
  %v31 = vadd.f32 %v29, %v30
  %v32 = vrot.slane %v31, 4
  %v33 = vadd.f32 %v31, %v32
  %v34 = vrot.slane %v33, 2
  %v35 = vadd.f32 %v33, %v34
  %v36 = vrot.slane %v35, 1
  %v37 = vadd.f32 %v35, %v36
  %v38 = vmul.f32 %v37, 0.03125
  %v39 = vsub.f32 %v18, %v38
  %v40 = vsub.f32 %v19, %v38
  %v41 = vsub.f32 %v20, %v38
  %v42 = vsub.f32 %v21, %v38
  %v43 = vmul.f32 %v39, %v39
  %v44 = vmul.f32 %v40, %v40
  %v45 = vmul.f32 %v41, %v41
  %v46 = vmul.f32 %v42, %v42
  %v47 = vsel %vm24, %v43, 0.0
  %v48 = vsel %vm24, %v44, 0.0
  %v49 = vadd.f32 %v47, %v48
  %v50 = vsel %vm24, %v45, 0.0
  %v51 = vadd.f32 %v49, %v50
  %v52 = vsel %vm24, %v46, 0.0
  %v53 = vadd.f32 %v51, %v52
  %v54 = vrot.slane %v53, 4
  %v55 = vadd.f32 %v53, %v54
  %v56 = vrot.slane %v55, 2
  %v57 = vadd.f32 %v55, %v56
  %v58 = vrot.slane %v57, 1
  %v59 = vadd.f32 %v57, %v58
  %v60 = vmul.f32 %v59, 0.03125
  %v61 = vadd.f32 %v60, 1e-05
  %v62 = vrsqrt.pop %v61
  %v63 = vmul.f32 %v62, %v61
  %v64 = vmul.f32 %v63, %v62
  %v65 = vmul.f32 0.5, %v64
  %v66 = vsub.f32 1.5, %v65
  %v67 = vmul.f32 %v62, %v66
  %vm68 = vweird.f32 %v61
  %vm69 = vweird.f32 %v62
  %vm70 = vmor %vm68, %vm69
  %v71 = vsel %vm70, %v62, %v67
  %v72 = vmul.f32 %v39, %v71
  %v73 = vmul.f32 %v40, %v71
  %v74 = vmul.f32 %v41, %v71
  %v75 = vmul.f32 %v42, %v71
  %v77 = vperm.slane %v22, 0
  %v79 = vmul.f32 %v72, %v77
  %v80 = vmul.f32 %v73, %v77
  %v81 = vmul.f32 %v74, %v77
  %v82 = vmul.f32 %v75, %v77
  %v84 = vperm.slane %v23, 0
  %v86 = vadd.f32 %v79, %v84
  %v87 = vadd.f32 %v80, %v84
  %v88 = vadd.f32 %v81, %v84
  %v89 = vadd.f32 %v82, %v84
  %90 = vst.msk [vmem:[%s3] sm:$0xff] %vm24, %v86
  %91 = vst.msk [vmem:[%s3 + $0x8] sm:$0xff] %vm24, %v87
  %92 = vst.msk [vmem:[%s3 + $0x10] sm:$0xff] %vm24, %v88
  %93 = vst.msk [vmem:[%s3 + $0x18] sm:$0xff] %vm24, %v89
  // Predicated region
  $region14: #{_lambda_.12} parent=0 // pred_check
    _
  $region15: #{_lambda_.12} parent=0 // pred_check_branch
    %95 = sbr.rel (0) target = $region17
  $region16: #{_lambda_.12} parent=0 // pred_region
    _
  $region17: #{_lambda_.12} parent=0 // pred_fallthru
    _
  // Predicated region
  $region18: #{_lambda_.12} parent=0 // pred_check
    _
  $region19: #{_lambda_.12} parent=0 // pred_check_branch
    %97 = sbr.rel (0) target = $region21
  $region20: #{_lambda_.12} parent=0 // pred_region
    _
  $region21: #{_lambda_.12} parent=0 // pred_fallthru
    _

// kernel: _lambda_.13
$region0: #{_lambda_.13}
  #allocation0 [shape = 'u32[]', space=smem, size = 0x4, offset = 0x4, fixed_abs, tag = 'smem constant byte address 0x4 - core index']
  #allocation1 [shape = 'u32[72,128]{1,0:T(1,128)}', space=vmem, size = 0x9000, scoped, tag = 'internal scratch']
  %s0 = inlined_call_operand.vmem [shape: bf16[32,16], index: 0, kind: input, shape index: {}]
  %s1 = inlined_call_operand.vmem [shape: bf16[16,72], index: 1, kind: input, shape index: {}]
  %s2 = inlined_call_operand.vmem [shape: f32[1,72], index: 2, kind: input, shape index: {}]
  %s3 = inlined_call_operand.vmem [shape: f32[32,72], index: 3, kind: output, shape index: {}]
  %s4 = sld [smem:[#allocation0]]
  $region22: #{_lambda_.13} parent=0
    _
  %s6 = ssub.s32 1, %s4
  %s7 = scalar_select 0, %s6, %s4
  // Predicated region
  $region2: #{_lambda_.13} parent=0 // pred_check
    _
  $region3: #{_lambda_.13} parent=0 // pred_check_branch
    %9 = sbr.rel (0) target = $region5
  $region4: #{_lambda_.13} parent=0 // pred_region
    _
  $region5: #{_lambda_.13} parent=0 // pred_fallthru
    _
  // Predicated region
  $region6: #{_lambda_.13} parent=0 // pred_check
    _
  $region7: #{_lambda_.13} parent=0 // pred_check_branch
    %11 = sbr.rel (0) target = $region9
  $region8: #{_lambda_.13} parent=0 // pred_region
    _
  $region9: #{_lambda_.13} parent=0 // pred_fallthru
    _
  // Predicated region
  $region10: #{_lambda_.13} parent=0 // pred_check
    _
  $region11: #{_lambda_.13} parent=0 // pred_check_branch
    %13 = sbr.rel (0) target = $region13
  $region12: #{_lambda_.13} parent=0 // pred_region
    _
  $region13: #{_lambda_.13} parent=0 // pred_fallthru
    _
  %v15 = vld [vmem:[%s0] sm:$0xf]
  %v16 = vld [vmem:[%s0 + $0x4] sm:$0xf]
  %v17 = vld [vmem:[%s0 + $0x8] sm:$0xf]
  %v18 = vld [vmem:[%s0 + $0xc] sm:$0xf]
  %v19 = vld [vmem:[%s1] sm:$0xf]
  %v20 = vld [vmem:[%s1 + $0x4] sm:$0xf]
  %v21 = vld [vmem:[%s2] sm:$0x1]
  %v23 = vperm.slane %v21, 0
  %v29 = vunpack.c.l.b16 %v15
  %v30 = vunpack.c.l.b16 %v16
  %v31 = vunpack.c.l.b16 %v17
  %v32 = vunpack.c.l.b16 %v18
  %v33 = vpack.c.b16 %v30, %v29
  %v34 = vpack.c.b16 %v32, %v31
  %v37 = vunpack.c.l.b16 %v19
  %v38 = vunpack.c.l.b16 %v20
  %v39 = vpack.c.b16 %v38, %v37
  %vm41 = vcmask 130048
  %v43 = vsel %vm41, %v33, 0
  %v46 = vsel %vm41, %v34, 0
  %48 = vmatpush.bf16.msra.mxu0 0
  %49 = vmatpush.bf16.msra.mxu0 0
  %50 = vmatpush.bf16.msra.mxu0 0
  %51 = vmatpush.bf16.msra.mxu0 0
  %52 = vmatpush.bf16.msra.mxu0 0
  %53 = vmatpush.bf16.msra.mxu0 0
  %54 = vmatpush.bf16.msra.mxu0 0
  %55 = vmatpush.bf16.msra.mxu0 %v39
  %56 = vmatmul.bf16.gmra.mxu0 %v43
  %v57 = vpop.f32.mrf.mxu0
  %v58 = vadd.f32 %v23, %v57
  %v59 = vpop.f32.mrf.mxu0
  %v60 = vadd.f32 %v23, %v59
  %61 = vmatmul.bf16.gmra.mxu0 %v46
  %v62 = vpop.f32.mrf.mxu0
  %v63 = vadd.f32 %v23, %v62
  %v64 = vpop.f32.mrf.mxu0
  %v65 = vadd.f32 %v23, %v64
  %66 = vdwg.mxu0
  %vm67 = vcmask 588800
  %68 = vst.msk [vmem:[%s3] sm:$0xff] %vm67, %v58
  %69 = vst.msk [vmem:[%s3 + $0x8] sm:$0xff] %vm67, %v60
  %70 = vst.msk [vmem:[%s3 + $0x10] sm:$0xff] %vm67, %v63
  %71 = vst.msk [vmem:[%s3 + $0x18] sm:$0xff] %vm67, %v65
  // Predicated region
  $region14: #{_lambda_.13} parent=0 // pred_check
    _
  $region15: #{_lambda_.13} parent=0 // pred_check_branch
    %73 = sbr.rel (0) target = $region17
  $region16: #{_lambda_.13} parent=0 // pred_region
    _
  $region17: #{_lambda_.13} parent=0 // pred_fallthru
    _
  // Predicated region
  $region18: #{_lambda_.13} parent=0 // pred_check
    _
  $region19: #{_lambda_.13} parent=0 // pred_check_branch
    %75 = sbr.rel (0) target = $region21
  $region20: #{_lambda_.13} parent=0 // pred_region
    _
  $region21: #{_lambda_.13} parent=0 // pred_fallthru
    _

// kernel: _lambda_.14
$region0: #{_lambda_.14}
  #allocation0 [shape = 'u32[]', space=smem, size = 0x4, offset = 0x4, fixed_abs, tag = 'smem constant byte address 0x4 - core index']
  #allocation1 [shape = 'u32[72,128]{1,0:T(1,128)}', space=vmem, size = 0x9000, scoped, tag = 'internal scratch']
  %s0 = inlined_call_operand.vmem [shape: f32[128,8], index: 0, kind: input, shape index: {}]
  %s1 = inlined_call_operand.vmem [shape: f32[128,8], index: 1, kind: input, shape index: {}]
  %s2 = inlined_call_operand.vmem [shape: f32[1,8], index: 2, kind: input, shape index: {}]
  %s3 = inlined_call_operand.vmem [shape: f32[1,8], index: 3, kind: input, shape index: {}]
  %s4 = inlined_call_operand.vmem [shape: f32[128,8], index: 4, kind: output, shape index: {0}]
  %s5 = inlined_call_operand.vmem [shape: f32[128,8], index: 5, kind: output, shape index: {1}]
  %6 = xla_tuple %s4, %s5
  %s7 = sld [smem:[#allocation0]]
  $region34: #{_lambda_.14} parent=0
    _
  %s9 = ssub.s32 1, %s7
  %s10 = scalar_select 0, %s9, %s7
  // Predicated region
  $region2: #{_lambda_.14} parent=0 // pred_check
    _
  $region3: #{_lambda_.14} parent=0 // pred_check_branch
    %12 = sbr.rel (0) target = $region5
  $region4: #{_lambda_.14} parent=0 // pred_region
    _
  $region5: #{_lambda_.14} parent=0 // pred_fallthru
    _
  // Predicated region
  $region6: #{_lambda_.14} parent=0 // pred_check
    _
  $region7: #{_lambda_.14} parent=0 // pred_check_branch
    %14 = sbr.rel (0) target = $region9
  $region8: #{_lambda_.14} parent=0 // pred_region
    _
  $region9: #{_lambda_.14} parent=0 // pred_fallthru
    _
  // Predicated region
  $region10: #{_lambda_.14} parent=0 // pred_check
    _
  $region11: #{_lambda_.14} parent=0 // pred_check_branch
    %16 = sbr.rel (0) target = $region13
  $region12: #{_lambda_.14} parent=0 // pred_region
    _
  $region13: #{_lambda_.14} parent=0 // pred_fallthru
    _
  // Predicated region
  $region14: #{_lambda_.14} parent=0 // pred_check
    _
  $region15: #{_lambda_.14} parent=0 // pred_check_branch
    %18 = sbr.rel (0) target = $region17
  $region16: #{_lambda_.14} parent=0 // pred_region
    _
  $region17: #{_lambda_.14} parent=0 // pred_fallthru
    _
  %v19 = vld [vmem:[%s0] sm:$0xff]
  %v20 = vld [vmem:[%s0 + $0x8] sm:$0xff]
  %v21 = vld [vmem:[%s0 + $0x10] sm:$0xff]
  %v22 = vld [vmem:[%s0 + $0x18] sm:$0xff]
  %v23 = vld [vmem:[%s0 + $0x20] sm:$0xff]
  %v24 = vld [vmem:[%s0 + $0x28] sm:$0xff]
  %v25 = vld [vmem:[%s0 + $0x30] sm:$0xff]
  %v26 = vld [vmem:[%s0 + $0x38] sm:$0xff]
  %v27 = vld [vmem:[%s0 + $0x40] sm:$0xff]
  %v28 = vld [vmem:[%s0 + $0x48] sm:$0xff]
  %v29 = vld [vmem:[%s0 + $0x50] sm:$0xff]
  %v30 = vld [vmem:[%s0 + $0x58] sm:$0xff]
  %v31 = vld [vmem:[%s0 + $0x60] sm:$0xff]
  %v32 = vld [vmem:[%s0 + $0x68] sm:$0xff]
  %v33 = vld [vmem:[%s0 + $0x70] sm:$0xff]
  %v34 = vld [vmem:[%s0 + $0x78] sm:$0xff]
  %v35 = vld [vmem:[%s1] sm:$0xff]
  %v36 = vld [vmem:[%s1 + $0x8] sm:$0xff]
  %v37 = vld [vmem:[%s1 + $0x10] sm:$0xff]
  %v38 = vld [vmem:[%s1 + $0x18] sm:$0xff]
  %v39 = vld [vmem:[%s1 + $0x20] sm:$0xff]
  %v40 = vld [vmem:[%s1 + $0x28] sm:$0xff]
  %v41 = vld [vmem:[%s1 + $0x30] sm:$0xff]
  %v42 = vld [vmem:[%s1 + $0x38] sm:$0xff]
  %v43 = vld [vmem:[%s1 + $0x40] sm:$0xff]
  %v44 = vld [vmem:[%s1 + $0x48] sm:$0xff]
  %v45 = vld [vmem:[%s1 + $0x50] sm:$0xff]
  %v46 = vld [vmem:[%s1 + $0x58] sm:$0xff]
  %v47 = vld [vmem:[%s1 + $0x60] sm:$0xff]
  %v48 = vld [vmem:[%s1 + $0x68] sm:$0xff]
  %v49 = vld [vmem:[%s1 + $0x70] sm:$0xff]
  %v50 = vld [vmem:[%s1 + $0x78] sm:$0xff]
  %v51 = vadd.f32 %v19, %v35
  %v52 = vadd.f32 %v20, %v36
  %v53 = vadd.f32 %v21, %v37
  %v54 = vadd.f32 %v22, %v38
  %v55 = vadd.f32 %v23, %v39
  %v56 = vadd.f32 %v24, %v40
  %v57 = vadd.f32 %v25, %v41
  %v58 = vadd.f32 %v26, %v42
  %v59 = vadd.f32 %v27, %v43
  %v60 = vadd.f32 %v28, %v44
  %v61 = vadd.f32 %v29, %v45
  %v62 = vadd.f32 %v30, %v46
  %v63 = vadd.f32 %v31, %v47
  %v64 = vadd.f32 %v32, %v48
  %v65 = vadd.f32 %v33, %v49
  %v66 = vadd.f32 %v34, %v50
  %vm67 = vcmask 64512
  %68 = vst.msk [vmem:[%s4] sm:$0xff] %vm67, %v51
  %69 = vst.msk [vmem:[%s4 + $0x8] sm:$0xff] %vm67, %v52
  %70 = vst.msk [vmem:[%s4 + $0x10] sm:$0xff] %vm67, %v53
  %71 = vst.msk [vmem:[%s4 + $0x18] sm:$0xff] %vm67, %v54
  %72 = vst.msk [vmem:[%s4 + $0x20] sm:$0xff] %vm67, %v55
  %73 = vst.msk [vmem:[%s4 + $0x28] sm:$0xff] %vm67, %v56
  %74 = vst.msk [vmem:[%s4 + $0x30] sm:$0xff] %vm67, %v57
  %75 = vst.msk [vmem:[%s4 + $0x38] sm:$0xff] %vm67, %v58
  %76 = vst.msk [vmem:[%s4 + $0x40] sm:$0xff] %vm67, %v59
  %77 = vst.msk [vmem:[%s4 + $0x48] sm:$0xff] %vm67, %v60
  %78 = vst.msk [vmem:[%s4 + $0x50] sm:$0xff] %vm67, %v61
  %79 = vst.msk [vmem:[%s4 + $0x58] sm:$0xff] %vm67, %v62
  %80 = vst.msk [vmem:[%s4 + $0x60] sm:$0xff] %vm67, %v63
  %81 = vst.msk [vmem:[%s4 + $0x68] sm:$0xff] %vm67, %v64
  %82 = vst.msk [vmem:[%s4 + $0x70] sm:$0xff] %vm67, %v65
  %83 = vst.msk [vmem:[%s4 + $0x78] sm:$0xff] %vm67, %v66
  %v84 = vmax.f32 %v51, 0.0
  %v85 = vmax.f32 %v52, 0.0
  %v86 = vmax.f32 %v53, 0.0
  %v87 = vmax.f32 %v54, 0.0
  %v88 = vmax.f32 %v55, 0.0
  %v89 = vmax.f32 %v56, 0.0
  %v90 = vmax.f32 %v57, 0.0
  %v91 = vmax.f32 %v58, 0.0
  %v92 = vmax.f32 %v59, 0.0
  %v93 = vmax.f32 %v60, 0.0
  %v94 = vmax.f32 %v61, 0.0
  %v95 = vmax.f32 %v62, 0.0
  %v96 = vmax.f32 %v63, 0.0
  %v97 = vmax.f32 %v64, 0.0
  %v98 = vmax.f32 %v65, 0.0
  %v99 = vmax.f32 %v66, 0.0
  %v100 = vld [vmem:[%s2] sm:$0x1]
  %v101 = vld [vmem:[%s3] sm:$0x1]
  %v102 = vsel %vm67, %v84, 0.0
  %v103 = vsel %vm67, %v85, 0.0
  %v104 = vadd.f32 %v102, %v103
  %v105 = vsel %vm67, %v86, 0.0
  %v106 = vadd.f32 %v104, %v105
  %v107 = vsel %vm67, %v87, 0.0
  %v108 = vadd.f32 %v106, %v107
  %v109 = vsel %vm67, %v88, 0.0
  %v110 = vadd.f32 %v108, %v109
  %v111 = vsel %vm67, %v89, 0.0
  %v112 = vadd.f32 %v110, %v111
  %v113 = vsel %vm67, %v90, 0.0
  %v114 = vadd.f32 %v112, %v113
  %v115 = vsel %vm67, %v91, 0.0
  %v116 = vadd.f32 %v114, %v115
  %v117 = vsel %vm67, %v92, 0.0
  %v118 = vadd.f32 %v116, %v117
  %v119 = vsel %vm67, %v93, 0.0
  %v120 = vadd.f32 %v118, %v119
  %v121 = vsel %vm67, %v94, 0.0
  %v122 = vadd.f32 %v120, %v121
  %v123 = vsel %vm67, %v95, 0.0
  %v124 = vadd.f32 %v122, %v123
  %v125 = vsel %vm67, %v96, 0.0
  %v126 = vadd.f32 %v124, %v125
  %v127 = vsel %vm67, %v97, 0.0
  %v128 = vadd.f32 %v126, %v127
  %v129 = vsel %vm67, %v98, 0.0
  %v130 = vadd.f32 %v128, %v129
  %v131 = vsel %vm67, %v99, 0.0
  %v132 = vadd.f32 %v130, %v131
  %v133 = vrot.slane %v132, 4
  %v134 = vadd.f32 %v132, %v133
  %v135 = vrot.slane %v134, 2
  %v136 = vadd.f32 %v134, %v135
  %v137 = vrot.slane %v136, 1
  %v138 = vadd.f32 %v136, %v137
  %v139 = vmul.f32 %v138, 0.0078125
  %v140 = vsub.f32 %v84, %v139
  %v141 = vsub.f32 %v85, %v139
  %v142 = vsub.f32 %v86, %v139
  %v143 = vsub.f32 %v87, %v139
  %v144 = vsub.f32 %v88, %v139
  %v145 = vsub.f32 %v89, %v139
  %v146 = vsub.f32 %v90, %v139
  %v147 = vsub.f32 %v91, %v139
  %v148 = vsub.f32 %v92, %v139
  %v149 = vsub.f32 %v93, %v139
  %v150 = vsub.f32 %v94, %v139
  %v151 = vsub.f32 %v95, %v139
  %v152 = vsub.f32 %v96, %v139
  %v153 = vsub.f32 %v97, %v139
  %v154 = vsub.f32 %v98, %v139
  %v155 = vsub.f32 %v99, %v139
  %v156 = vmul.f32 %v140, %v140
  %v157 = vmul.f32 %v141, %v141
  %v158 = vmul.f32 %v142, %v142
  %v159 = vmul.f32 %v143, %v143
  %v160 = vmul.f32 %v144, %v144
  %v161 = vmul.f32 %v145, %v145
  %v162 = vmul.f32 %v146, %v146
  %v163 = vmul.f32 %v147, %v147
  %v164 = vmul.f32 %v148, %v148
  %v165 = vmul.f32 %v149, %v149
  %v166 = vmul.f32 %v150, %v150
  %v167 = vmul.f32 %v151, %v151
  %v168 = vmul.f32 %v152, %v152
  %v169 = vmul.f32 %v153, %v153
  %v170 = vmul.f32 %v154, %v154
  %v171 = vmul.f32 %v155, %v155
  %v172 = vsel %vm67, %v156, 0.0
  %v173 = vsel %vm67, %v157, 0.0
  %v174 = vadd.f32 %v172, %v173
  %v175 = vsel %vm67, %v158, 0.0
  %v176 = vadd.f32 %v174, %v175
  %v177 = vsel %vm67, %v159, 0.0
  %v178 = vadd.f32 %v176, %v177
  %v179 = vsel %vm67, %v160, 0.0
  %v180 = vadd.f32 %v178, %v179
  %v181 = vsel %vm67, %v161, 0.0
  %v182 = vadd.f32 %v180, %v181
  %v183 = vsel %vm67, %v162, 0.0
  %v184 = vadd.f32 %v182, %v183
  %v185 = vsel %vm67, %v163, 0.0
  %v186 = vadd.f32 %v184, %v185
  %v187 = vsel %vm67, %v164, 0.0
  %v188 = vadd.f32 %v186, %v187
  %v189 = vsel %vm67, %v165, 0.0
  %v190 = vadd.f32 %v188, %v189
  %v191 = vsel %vm67, %v166, 0.0
  %v192 = vadd.f32 %v190, %v191
  %v193 = vsel %vm67, %v167, 0.0
  %v194 = vadd.f32 %v192, %v193
  %v195 = vsel %vm67, %v168, 0.0
  %v196 = vadd.f32 %v194, %v195
  %v197 = vsel %vm67, %v169, 0.0
  %v198 = vadd.f32 %v196, %v197
  %v199 = vsel %vm67, %v170, 0.0
  %v200 = vadd.f32 %v198, %v199
  %v201 = vsel %vm67, %v171, 0.0
  %v202 = vadd.f32 %v200, %v201
  %v203 = vrot.slane %v202, 4
  %v204 = vadd.f32 %v202, %v203
  %v205 = vrot.slane %v204, 2
  %v206 = vadd.f32 %v204, %v205
  %v207 = vrot.slane %v206, 1
  %v208 = vadd.f32 %v206, %v207
  %v209 = vmul.f32 %v208, 0.0078125
  %v210 = vadd.f32 %v209, 1e-05
  %v211 = vrsqrt.pop %v210
  %v212 = vmul.f32 %v211, %v210
  %v213 = vmul.f32 %v212, %v211
  %v214 = vmul.f32 0.5, %v213
  %v215 = vsub.f32 1.5, %v214
  %v216 = vmul.f32 %v211, %v215
  %vm217 = vweird.f32 %v210
  %vm218 = vweird.f32 %v211
  %vm219 = vmor %vm217, %vm218
  %v220 = vsel %vm219, %v211, %v216
  %v221 = vmul.f32 %v140, %v220
  %v222 = vmul.f32 %v141, %v220
  %v223 = vmul.f32 %v142, %v220
  %v224 = vmul.f32 %v143, %v220
  %v225 = vmul.f32 %v144, %v220
  %v226 = vmul.f32 %v145, %v220
  %v227 = vmul.f32 %v146, %v220
  %v228 = vmul.f32 %v147, %v220
  %v229 = vmul.f32 %v148, %v220
  %v230 = vmul.f32 %v149, %v220
  %v231 = vmul.f32 %v150, %v220
  %v232 = vmul.f32 %v151, %v220
  %v233 = vmul.f32 %v152, %v220
  %v234 = vmul.f32 %v153, %v220
  %v235 = vmul.f32 %v154, %v220
  %v236 = vmul.f32 %v155, %v220
  %v238 = vperm.slane %v100, 0
  %v240 = vmul.f32 %v221, %v238
  %v241 = vmul.f32 %v222, %v238
  %v242 = vmul.f32 %v223, %v238
  %v243 = vmul.f32 %v224, %v238
  %v244 = vmul.f32 %v225, %v238
  %v245 = vmul.f32 %v226, %v238
  %v246 = vmul.f32 %v227, %v238
  %v247 = vmul.f32 %v228, %v238
  %v248 = vmul.f32 %v229, %v238
  %v249 = vmul.f32 %v230, %v238
  %v250 = vmul.f32 %v231, %v238
  %v251 = vmul.f32 %v232, %v238
  %v252 = vmul.f32 %v233, %v238
  %v253 = vmul.f32 %v234, %v238
  %v254 = vmul.f32 %v235, %v238
  %v255 = vmul.f32 %v236, %v238
  %v257 = vperm.slane %v101, 0
  %v259 = vadd.f32 %v240, %v257
  %v260 = vadd.f32 %v241, %v257
  %v261 = vadd.f32 %v242, %v257
  %v262 = vadd.f32 %v243, %v257
  %v263 = vadd.f32 %v244, %v257
  %v264 = vadd.f32 %v245, %v257
  %v265 = vadd.f32 %v246, %v257
  %v266 = vadd.f32 %v247, %v257
  %v267 = vadd.f32 %v248, %v257
  %v268 = vadd.f32 %v249, %v257
  %v269 = vadd.f32 %v250, %v257
  %v270 = vadd.f32 %v251, %v257
  %v271 = vadd.f32 %v252, %v257
  %v272 = vadd.f32 %v253, %v257
  %v273 = vadd.f32 %v254, %v257
  %v274 = vadd.f32 %v255, %v257
  %275 = vst.msk [vmem:[%s5] sm:$0xff] %vm67, %v259
  %276 = vst.msk [vmem:[%s5 + $0x8] sm:$0xff] %vm67, %v260
  %277 = vst.msk [vmem:[%s5 + $0x10] sm:$0xff] %vm67, %v261
  %278 = vst.msk [vmem:[%s5 + $0x18] sm:$0xff] %vm67, %v262
  %279 = vst.msk [vmem:[%s5 + $0x20] sm:$0xff] %vm67, %v263
  %280 = vst.msk [vmem:[%s5 + $0x28] sm:$0xff] %vm67, %v264
  %281 = vst.msk [vmem:[%s5 + $0x30] sm:$0xff] %vm67, %v265
  %282 = vst.msk [vmem:[%s5 + $0x38] sm:$0xff] %vm67, %v266
  %283 = vst.msk [vmem:[%s5 + $0x40] sm:$0xff] %vm67, %v267
  %284 = vst.msk [vmem:[%s5 + $0x48] sm:$0xff] %vm67, %v268
  %285 = vst.msk [vmem:[%s5 + $0x50] sm:$0xff] %vm67, %v269
  %286 = vst.msk [vmem:[%s5 + $0x58] sm:$0xff] %vm67, %v270
  %287 = vst.msk [vmem:[%s5 + $0x60] sm:$0xff] %vm67, %v271
  %288 = vst.msk [vmem:[%s5 + $0x68] sm:$0xff] %vm67, %v272
  %289 = vst.msk [vmem:[%s5 + $0x70] sm:$0xff] %vm67, %v273
  %290 = vst.msk [vmem:[%s5 + $0x78] sm:$0xff] %vm67, %v274
  // Predicated region
  $region18: #{_lambda_.14} parent=0 // pred_check
    _
  $region19: #{_lambda_.14} parent=0 // pred_check_branch
    %292 = sbr.rel (0) target = $region21
  $region20: #{_lambda_.14} parent=0 // pred_region
    _
  $region21: #{_lambda_.14} parent=0 // pred_fallthru
    _
  // Predicated region
  $region22: #{_lambda_.14} parent=0 // pred_check
    _
  $region23: #{_lambda_.14} parent=0 // pred_check_branch
    %294 = sbr.rel (0) target = $region25
  $region24: #{_lambda_.14} parent=0 // pred_region
    _
  $region25: #{_lambda_.14} parent=0 // pred_fallthru
    _
  // Predicated region
  $region26: #{_lambda_.14} parent=0 // pred_check
    _
  $region27: #{_lambda_.14} parent=0 // pred_check_branch
    %296 = sbr.rel (0) target = $region29
  $region28: #{_lambda_.14} parent=0 // pred_region
    _
  $region29: #{_lambda_.14} parent=0 // pred_fallthru
    _
  // Predicated region
  $region30: #{_lambda_.14} parent=0 // pred_check
    _
  $region31: #{_lambda_.14} parent=0 // pred_check_branch
    %298 = sbr.rel (0) target = $region33
  $region32: #{_lambda_.14} parent=0 // pred_region
    _
  $region33: #{_lambda_.14} parent=0 // pred_fallthru
    _

// kernel: _lambda_.15
$region0: #{_lambda_.15}
  #allocation0 [shape = 'u32[]', space=smem, size = 0x4, offset = 0x4, fixed_abs, tag = 'smem constant byte address 0x4 - core index']
  #allocation1 [shape = 'u32[72,128]{1,0:T(1,128)}', space=vmem, size = 0x9000, scoped, tag = 'internal scratch']
  %s0 = inlined_call_operand.vmem [shape: bf16[128,8], index: 0, kind: input, shape index: {}]
  %s1 = inlined_call_operand.vmem [shape: bf16[8,36], index: 1, kind: input, shape index: {}]
  %s2 = inlined_call_operand.vmem [shape: f32[1,36], index: 2, kind: input, shape index: {}]
  %s3 = inlined_call_operand.vmem [shape: f32[128,36], index: 3, kind: output, shape index: {}]
  %s4 = sld [smem:[#allocation0]]
  $region22: #{_lambda_.15} parent=0
    _
  %s6 = ssub.s32 1, %s4
  %s7 = scalar_select 0, %s6, %s4
  // Predicated region
  $region2: #{_lambda_.15} parent=0 // pred_check
    _
  $region3: #{_lambda_.15} parent=0 // pred_check_branch
    %9 = sbr.rel (0) target = $region5
  $region4: #{_lambda_.15} parent=0 // pred_region
    _
  $region5: #{_lambda_.15} parent=0 // pred_fallthru
    _
  // Predicated region
  $region6: #{_lambda_.15} parent=0 // pred_check
    _
  $region7: #{_lambda_.15} parent=0 // pred_check_branch
    %11 = sbr.rel (0) target = $region9
  $region8: #{_lambda_.15} parent=0 // pred_region
    _
  $region9: #{_lambda_.15} parent=0 // pred_fallthru
    _
  // Predicated region
  $region10: #{_lambda_.15} parent=0 // pred_check
    _
  $region11: #{_lambda_.15} parent=0 // pred_check_branch
    %13 = sbr.rel (0) target = $region13
  $region12: #{_lambda_.15} parent=0 // pred_region
    _
  $region13: #{_lambda_.15} parent=0 // pred_fallthru
    _
  %v15 = vld [vmem:[%s0] sm:$0xf]
  %v16 = vld [vmem:[%s0 + $0x4] sm:$0xf]
  %v17 = vld [vmem:[%s0 + $0x8] sm:$0xf]
  %v18 = vld [vmem:[%s0 + $0xc] sm:$0xf]
  %v19 = vld [vmem:[%s0 + $0x10] sm:$0xf]
  %v20 = vld [vmem:[%s0 + $0x14] sm:$0xf]
  %v21 = vld [vmem:[%s0 + $0x18] sm:$0xf]
  %v22 = vld [vmem:[%s0 + $0x1c] sm:$0xf]
  %v23 = vld [vmem:[%s0 + $0x20] sm:$0xf]
  %v24 = vld [vmem:[%s0 + $0x24] sm:$0xf]
  %v25 = vld [vmem:[%s0 + $0x28] sm:$0xf]
  %v26 = vld [vmem:[%s0 + $0x2c] sm:$0xf]
  %v27 = vld [vmem:[%s0 + $0x30] sm:$0xf]
  %v28 = vld [vmem:[%s0 + $0x34] sm:$0xf]
  %v29 = vld [vmem:[%s0 + $0x38] sm:$0xf]
  %v30 = vld [vmem:[%s0 + $0x3c] sm:$0xf]
  %v31 = vld [vmem:[%s1] sm:$0xf]
  %v32 = vld [vmem:[%s2] sm:$0x1]
  %v34 = vperm.slane %v32, 0
  %v52 = vunpack.c.l.b16 %v15
  %v53 = vunpack.c.l.b16 %v16
  %v54 = vunpack.c.l.b16 %v17
  %v55 = vunpack.c.l.b16 %v18
  %v56 = vunpack.c.l.b16 %v19
  %v57 = vunpack.c.l.b16 %v20
  %v58 = vunpack.c.l.b16 %v21
  %v59 = vunpack.c.l.b16 %v22
  %v60 = vunpack.c.l.b16 %v23
  %v61 = vunpack.c.l.b16 %v24
  %v62 = vunpack.c.l.b16 %v25
  %v63 = vunpack.c.l.b16 %v26
  %v64 = vunpack.c.l.b16 %v27
  %v65 = vunpack.c.l.b16 %v28
  %v66 = vunpack.c.l.b16 %v29
  %v67 = vunpack.c.l.b16 %v30
  %v68 = vpack.c.b16 %v53, %v52
  %v69 = vpack.c.b16 %v55, %v54
  %v70 = vpack.c.b16 %v57, %v56
  %v71 = vpack.c.b16 %v59, %v58
  %v72 = vpack.c.b16 %v61, %v60
  %v73 = vpack.c.b16 %v63, %v62
  %v74 = vpack.c.b16 %v65, %v64
  %v75 = vpack.c.b16 %v67, %v66
  %vm76 = vcmask 64512
  %v78 = vsel %vm76, %v68, 0
  %v81 = vsel %vm76, %v69, 0
  %v84 = vsel %vm76, %v70, 0
  %v87 = vsel %vm76, %v71, 0
  %v90 = vsel %vm76, %v72, 0
  %v93 = vsel %vm76, %v73, 0
  %v96 = vsel %vm76, %v74, 0
  %v99 = vsel %vm76, %v75, 0
  %vm101 = vcmask 1043456
  %v103 = vsel %vm101, %v31, 0
  %105 = vmatpush.bf16.msra.mxu0 0
  %106 = vmatpush.bf16.msra.mxu0 0
  %107 = vmatpush.bf16.msra.mxu0 0
  %108 = vmatpush.bf16.msra.mxu0 0
  %109 = vmatpush.bf16.msra.mxu0 0
  %110 = vmatpush.bf16.msra.mxu0 0
  %111 = vmatpush.bf16.msra.mxu0 0
  %112 = vmatpush.bf16.msra.mxu0 %v103
  %113 = vmatmul.bf16.gmra.mxu0 %v78
  %v114 = vpop.f32.mrf.mxu0
  %v115 = vadd.f32 %v34, %v114
  %v116 = vpop.f32.mrf.mxu0
  %v117 = vadd.f32 %v34, %v116
  %118 = vmatmul.bf16.gmra.mxu0 %v81
  %v119 = vpop.f32.mrf.mxu0
  %v120 = vadd.f32 %v34, %v119
  %v121 = vpop.f32.mrf.mxu0
  %v122 = vadd.f32 %v34, %v121
  %123 = vmatmul.bf16.gmra.mxu0 %v84
  %v124 = vpop.f32.mrf.mxu0
  %v125 = vadd.f32 %v34, %v124
  %v126 = vpop.f32.mrf.mxu0
  %v127 = vadd.f32 %v34, %v126
  %128 = vmatmul.bf16.gmra.mxu0 %v87
  %v129 = vpop.f32.mrf.mxu0
  %v130 = vadd.f32 %v34, %v129
  %v131 = vpop.f32.mrf.mxu0
  %v132 = vadd.f32 %v34, %v131
  %133 = vmatmul.bf16.gmra.mxu0 %v90
  %v134 = vpop.f32.mrf.mxu0
  %v135 = vadd.f32 %v34, %v134
  %v136 = vpop.f32.mrf.mxu0
  %v137 = vadd.f32 %v34, %v136
  %138 = vmatmul.bf16.gmra.mxu0 %v93
  %v139 = vpop.f32.mrf.mxu0
  %v140 = vadd.f32 %v34, %v139
  %v141 = vpop.f32.mrf.mxu0
  %v142 = vadd.f32 %v34, %v141
  %143 = vmatmul.bf16.gmra.mxu0 %v96
  %v144 = vpop.f32.mrf.mxu0
  %v145 = vadd.f32 %v34, %v144
  %v146 = vpop.f32.mrf.mxu0
  %v147 = vadd.f32 %v34, %v146
  %148 = vmatmul.bf16.gmra.mxu0 %v99
  %v149 = vpop.f32.mrf.mxu0
  %v150 = vadd.f32 %v34, %v149
  %v151 = vpop.f32.mrf.mxu0
  %v152 = vadd.f32 %v34, %v151
  %153 = vdwg.mxu0
  %vm154 = vcmask 293888
  %155 = vst.msk [vmem:[%s3] sm:$0xff] %vm154, %v115
  %156 = vst.msk [vmem:[%s3 + $0x8] sm:$0xff] %vm154, %v117
  %157 = vst.msk [vmem:[%s3 + $0x10] sm:$0xff] %vm154, %v120
  %158 = vst.msk [vmem:[%s3 + $0x18] sm:$0xff] %vm154, %v122
  %159 = vst.msk [vmem:[%s3 + $0x20] sm:$0xff] %vm154, %v125
  %160 = vst.msk [vmem:[%s3 + $0x28] sm:$0xff] %vm154, %v127
  %161 = vst.msk [vmem:[%s3 + $0x30] sm:$0xff] %vm154, %v130
  %162 = vst.msk [vmem:[%s3 + $0x38] sm:$0xff] %vm154, %v132
  %163 = vst.msk [vmem:[%s3 + $0x40] sm:$0xff] %vm154, %v135
  %164 = vst.msk [vmem:[%s3 + $0x48] sm:$0xff] %vm154, %v137
  %165 = vst.msk [vmem:[%s3 + $0x50] sm:$0xff] %vm154, %v140
  %166 = vst.msk [vmem:[%s3 + $0x58] sm:$0xff] %vm154, %v142
  %167 = vst.msk [vmem:[%s3 + $0x60] sm:$0xff] %vm154, %v145
  %168 = vst.msk [vmem:[%s3 + $0x68] sm:$0xff] %vm154, %v147
  %169 = vst.msk [vmem:[%s3 + $0x70] sm:$0xff] %vm154, %v150
  %170 = vst.msk [vmem:[%s3 + $0x78] sm:$0xff] %vm154, %v152
  // Predicated region
  $region14: #{_lambda_.15} parent=0 // pred_check
    _
  $region15: #{_lambda_.15} parent=0 // pred_check_branch
    %172 = sbr.rel (0) target = $region17
  $region16: #{_lambda_.15} parent=0 // pred_region
    _
  $region17: #{_lambda_.15} parent=0 // pred_fallthru
    _
  // Predicated region
  $region18: #{_lambda_.15} parent=0 // pred_check
    _
  $region19: #{_lambda_.15} parent=0 // pred_check_branch
    %174 = sbr.rel (0) target = $region21
  $region20: #{_lambda_.15} parent=0 // pred_region
    _
  $region21: #{_lambda_.15} parent=0 // pred_fallthru
    _

// kernel: _lambda_.17
$region0: #{_lambda_.17}
  #allocation0 [shape = 'u32[]', space=smem, size = 0x4, offset = 0x4, fixed_abs, tag = 'smem constant byte address 0x4 - core index']
  #allocation1 [shape = 'u32[72,128]{1,0:T(1,128)}', space=vmem, size = 0x9000, scoped, tag = 'internal scratch']
  %s0 = inlined_call_operand.vmem [shape: f32[2,16,16], index: 0, kind: input, shape index: {}]
  %s1 = inlined_call_operand.vmem [shape: f32[16,10], index: 1, kind: input, shape index: {}]
  %s2 = inlined_call_operand.vmem [shape: f32[1,10], index: 2, kind: input, shape index: {}]
  %s3 = inlined_call_operand.hbm [shape: f32[2,16], index: 3, kind: output, shape index: {0}]
  %s4 = inlined_call_operand.hbm [shape: f32[2,10], index: 4, kind: output, shape index: {1}]
  %5 = xla_tuple %s3, %s4
  %s6 = sld [smem:[#allocation0]]
  $region30: #{_lambda_.17} parent=0
    _
  %s8 = ssub.s32 1, %s6
  %s9 = scalar_select 0, %s8, %s6
  $region1: #{_lambda_.17} parent=0
    #allocation2 [shape = 'u8[1024]{0}', space=vmem, size = 0x400, scoped, tag = 'output window, operand 0, single buffered']
    #allocation3 [shape = 's32[1]{0}', space=sflag, size = 0x4, scoped, tag = 'scoped memory for _lambda_.17']
    #allocation4 [shape = 'u8[1024]{0}', space=vmem, size = 0x400, scoped, tag = 'output window, operand 1, single buffered']
    #allocation5 [shape = 's32[1]{0}', space=sflag, size = 0x4, scoped, tag = 'scoped memory for _lambda_.17']
    %10 = vsyncpa [#allocation3], 0
    %11 = vsyncpa [#allocation5], 0
    // Predicated region
    $region2: #{_lambda_.17} parent=1 // pred_check
      _
    $region3: #{_lambda_.17} parent=1 // pred_check_branch
      %13 = sbr.rel (0) target = $region5
    $region4: #{_lambda_.17} parent=1 // pred_region
      _
    $region5: #{_lambda_.17} parent=1 // pred_fallthru
      _
    // Predicated region
    $region6: #{_lambda_.17} parent=1 // pred_check
      _
    $region7: #{_lambda_.17} parent=1 // pred_check_branch
      %15 = sbr.rel (0) target = $region9
    $region8: #{_lambda_.17} parent=1 // pred_region
      _
    $region9: #{_lambda_.17} parent=1 // pred_fallthru
      _
    // Predicated region
    $region10: #{_lambda_.17} parent=1 // pred_check
      _
    $region11: #{_lambda_.17} parent=1 // pred_check_branch
      %17 = sbr.rel (0) target = $region13
    $region12: #{_lambda_.17} parent=1 // pred_region
      _
    $region13: #{_lambda_.17} parent=1 // pred_fallthru
      _
    %v18 = vld [vmem:[%s0] sm:$0xff]
    %v19 = vld [vmem:[%s0 + $0x8] sm:$0xff]
    %v20 = vld [vmem:[%s0 + $0x10] sm:$0xff]
    %v21 = vld [vmem:[%s0 + $0x18] sm:$0xff]
    %vm22 = vcmask 130048
    %v23 = vsel %vm22, %v18, 0.0
    %v24 = vsel %vm22, %v19, 0.0
    %v25 = vadd.f32 %v23, %v24
    %v26 = vrot.slane %v25, 4
    %v27 = vadd.f32 %v25, %v26
    %v28 = vrot.slane %v27, 2
    %v29 = vadd.f32 %v27, %v28
    %v30 = vrot.slane %v29, 1
    %v31 = vadd.f32 %v29, %v30
    %v32 = vsel %vm22, %v20, 0.0
    %v33 = vsel %vm22, %v21, 0.0
    %v34 = vadd.f32 %v32, %v33
    %v35 = vrot.slane %v34, 4
    %v36 = vadd.f32 %v34, %v35
    %v37 = vrot.slane %v36, 2
    %v38 = vadd.f32 %v36, %v37
    %v39 = vrot.slane %v38, 1
    %v40 = vadd.f32 %v38, %v39
    %v41 = vmul.f32 %v31, 0.0625
    %v42 = vmul.f32 %v40, 0.0625
    %vm45 = vcmask 1041409
    %v46 = vsel %vm45, %v42, %v41
    %vm48 = vcmask 123904
    %49 = vst.msk [vmem:[#allocation2] sm:$0x3] %vm48, %v46
    %v50 = vlaneseq
    %v51 = vshrl.u32 %v50, 7
    %53 = vset.pattern.permute.xlu0 %v51
    %54 = vperm.xlu0 %53, %v41
    %v55 = vpop.permute.xlu0 %54
    %v56 = vlaneseq
    %v57 = vshrl.u32 %v56, 7
    %v58 = vadd.s32 %v57, 8
    %59 = vset.pattern.permute.xlu0 %v58
    %60 = vperm.xlu0 %59, %v41
    %v61 = vpop.permute.xlu0 %60
    %v62 = vlaneseq
    %v63 = vshrl.u32 %v62, 7
    %65 = vset.pattern.permute.xlu0 %v63
    %66 = vperm.xlu0 %65, %v42
    %v67 = vpop.permute.xlu0 %66
    %v68 = vlaneseq
    %v69 = vshrl.u32 %v68, 7
    %v70 = vadd.s32 %v69, 8
    %71 = vset.pattern.permute.xlu0 %v70
    %72 = vperm.xlu0 %71, %v42
    %v73 = vpop.permute.xlu0 %72
    %v74 = vld [vmem:[%s1] sm:$0xff]
    %v75 = vld [vmem:[%s1 + $0x8] sm:$0xff]
    %v76 = vmul.f32 %v55, %v74
    %v77 = vmul.f32 %v61, %v75
    %v78 = vmul.f32 %v67, %v74
    %v79 = vmul.f32 %v73, %v75
    %vm80 = vcmask 80896
    %v81 = vsel %vm80, %v76, 0.0
    %v82 = vsel %vm80, %v77, 0.0
    %v83 = vadd.f32 %v81, %v82
    %v84 = vrot.slane %v83, 4
    %v85 = vadd.f32 %v83, %v84
    %v86 = vrot.slane %v85, 2
    %v87 = vadd.f32 %v85, %v86
    %v88 = vrot.slane %v87, 1
    %v89 = vadd.f32 %v87, %v88
    %v90 = vsel %vm80, %v78, 0.0
    %v91 = vsel %vm80, %v79, 0.0
    %v92 = vadd.f32 %v90, %v91
    %v93 = vrot.slane %v92, 4
    %v94 = vadd.f32 %v92, %v93
    %v95 = vrot.slane %v94, 2
    %v96 = vadd.f32 %v94, %v95
    %v97 = vrot.slane %v96, 1
    %v98 = vadd.f32 %v96, %v97
    %v99 = vld [vmem:[%s2] sm:$0x1]
    %v101 = vperm.slane %v99, 0
    %v103 = vadd.f32 %v89, %v101
    %v104 = vadd.f32 %v98, %v101
    %v107 = vrot.slane %v104, 7
    %v108 = vsel %vm45, %v107, %v103
    %vm110 = vcmask 74752
    %111 = vst.msk [vmem:[#allocation4] sm:$0x3] %vm110, %v108
    // Predicated region
    $region14: #{_lambda_.17} parent=1 // pred_check
      _
    $region15: #{_lambda_.17} parent=1 // pred_check_branch
      %113 = sbr.rel (0) target = $region17
    $region16: #{_lambda_.17} parent=1 // pred_region
      %115 = vsyncadd [#allocation3], 0
      %s117 = sshll.u32 [#allocation2], 4
      %s118 = int_to_ptr.vmem [resolvable:$true] %s117
      %s119 = sshll.u32 %s3, 4
      %s120 = int_to_ptr.hbm [resolvable:$true] %s119
      %122 = dma.vmem_to_hbm [thread:$0]  %s118, 32, %s120, [#allocation3]
    $region17: #{_lambda_.17} parent=1 // pred_fallthru
      _
    // Predicated region
    $region18: #{_lambda_.17} parent=1 // pred_check
      _
    $region19: #{_lambda_.17} parent=1 // pred_check_branch
      %124 = sbr.rel (0) target = $region21
    $region20: #{_lambda_.17} parent=1 // pred_region
      %126 = vsyncadd [#allocation5], 0
      %s128 = sshll.u32 [#allocation4], 4
      %s129 = int_to_ptr.vmem [resolvable:$true] %s128
      %s130 = sshll.u32 %s4, 4
      %s131 = int_to_ptr.hbm [resolvable:$true] %s130
      %133 = dma.vmem_to_hbm [thread:$0]  %s129, 32, %s131, [#allocation5]
    $region21: #{_lambda_.17} parent=1 // pred_fallthru
      _
    // Predicated region
    $region22: #{_lambda_.17} parent=1 // pred_check
      _
    $region23: #{_lambda_.17} parent=1 // pred_check_branch
      %135 = sbr.rel (0) target = $region25
    $region24: #{_lambda_.17} parent=1 // pred_region
      %137 = dma.done [#allocation3], 32
    $region25: #{_lambda_.17} parent=1 // pred_fallthru
      _
    // Predicated region
    $region26: #{_lambda_.17} parent=1 // pred_check
      _
    $region27: #{_lambda_.17} parent=1 // pred_check_branch
      %139 = sbr.rel (0) target = $region29
    $region28: #{_lambda_.17} parent=1 // pred_region
      %141 = dma.done [#allocation5], 32
    $region29: #{_lambda_.17} parent=1 // pred_fallthru
      _
    %142 = vsyncpa [#allocation3], 1
    %143 = vsyncpa [#allocation5], 1

// kernel: _lambda_.16
$region0: #{_lambda_.16}
  #allocation0 [shape = 'u32[]', space=smem, size = 0x4, offset = 0x4, fixed_abs, tag = 'smem constant byte address 0x4 - core index']
  #allocation1 [shape = 'u32[72,128]{1,0:T(1,128)}', space=vmem, size = 0x9000, scoped, tag = 'internal scratch']
  %s0 = inlined_call_operand.vmem [shape: f32[512,4], index: 0, kind: input, shape index: {}]
  %s1 = inlined_call_operand.vmem [shape: f32[1,4], index: 1, kind: input, shape index: {}]
  %s2 = inlined_call_operand.vmem [shape: f32[1,4], index: 2, kind: input, shape index: {}]
  %s3 = inlined_call_operand.vmem [shape: f32[512,4], index: 3, kind: output, shape index: {}]
  %s4 = sld [smem:[#allocation0]]
  $region22: #{_lambda_.16} parent=0
    _
  %s6 = ssub.s32 1, %s4
  %s7 = scalar_select 0, %s6, %s4
  // Predicated region
  $region2: #{_lambda_.16} parent=0 // pred_check
    _
  $region3: #{_lambda_.16} parent=0 // pred_check_branch
    %9 = sbr.rel (0) target = $region5
  $region4: #{_lambda_.16} parent=0 // pred_region
    _
  $region5: #{_lambda_.16} parent=0 // pred_fallthru
    _
  // Predicated region
  $region6: #{_lambda_.16} parent=0 // pred_check
    _
  $region7: #{_lambda_.16} parent=0 // pred_check_branch
    %11 = sbr.rel (0) target = $region9
  $region8: #{_lambda_.16} parent=0 // pred_region
    _
  $region9: #{_lambda_.16} parent=0 // pred_fallthru
    _
  // Predicated region
  $region10: #{_lambda_.16} parent=0 // pred_check
    _
  $region11: #{_lambda_.16} parent=0 // pred_check_branch
    %13 = sbr.rel (0) target = $region13
  $region12: #{_lambda_.16} parent=0 // pred_region
    _
  $region13: #{_lambda_.16} parent=0 // pred_fallthru
    _
  %v14 = vld [vmem:[%s0] sm:$0xff]
  %v15 = vld [vmem:[%s0 + $0x8] sm:$0xff]
  %v16 = vld [vmem:[%s0 + $0x10] sm:$0xff]
  %v17 = vld [vmem:[%s0 + $0x18] sm:$0xff]
  %v18 = vld [vmem:[%s0 + $0x20] sm:$0xff]
  %v19 = vld [vmem:[%s0 + $0x28] sm:$0xff]
  %v20 = vld [vmem:[%s0 + $0x30] sm:$0xff]
  %v21 = vld [vmem:[%s0 + $0x38] sm:$0xff]
  %v22 = vld [vmem:[%s0 + $0x40] sm:$0xff]
  %v23 = vld [vmem:[%s0 + $0x48] sm:$0xff]
  %v24 = vld [vmem:[%s0 + $0x50] sm:$0xff]
  %v25 = vld [vmem:[%s0 + $0x58] sm:$0xff]
  %v26 = vld [vmem:[%s0 + $0x60] sm:$0xff]
  %v27 = vld [vmem:[%s0 + $0x68] sm:$0xff]
  %v28 = vld [vmem:[%s0 + $0x70] sm:$0xff]
  %v29 = vld [vmem:[%s0 + $0x78] sm:$0xff]
  %v30 = vld [vmem:[%s0 + $0x80] sm:$0xff]
  %v31 = vld [vmem:[%s0 + $0x88] sm:$0xff]
  %v32 = vld [vmem:[%s0 + $0x90] sm:$0xff]
  %v33 = vld [vmem:[%s0 + $0x98] sm:$0xff]
  %v34 = vld [vmem:[%s0 + $0xa0] sm:$0xff]
  %v35 = vld [vmem:[%s0 + $0xa8] sm:$0xff]
  %v36 = vld [vmem:[%s0 + $0xb0] sm:$0xff]
  %v37 = vld [vmem:[%s0 + $0xb8] sm:$0xff]
  %v38 = vld [vmem:[%s0 + $0xc0] sm:$0xff]
  %v39 = vld [vmem:[%s0 + $0xc8] sm:$0xff]
  %v40 = vld [vmem:[%s0 + $0xd0] sm:$0xff]
  %v41 = vld [vmem:[%s0 + $0xd8] sm:$0xff]
  %v42 = vld [vmem:[%s0 + $0xe0] sm:$0xff]
  %v43 = vld [vmem:[%s0 + $0xe8] sm:$0xff]
  %v44 = vld [vmem:[%s0 + $0xf0] sm:$0xff]
  %v45 = vld [vmem:[%s0 + $0xf8] sm:$0xff]
  %v46 = vld [vmem:[%s0 + $0x100] sm:$0xff]
  %v47 = vld [vmem:[%s0 + $0x108] sm:$0xff]
  %v48 = vld [vmem:[%s0 + $0x110] sm:$0xff]
  %v49 = vld [vmem:[%s0 + $0x118] sm:$0xff]
  %v50 = vld [vmem:[%s0 + $0x120] sm:$0xff]
  %v51 = vld [vmem:[%s0 + $0x128] sm:$0xff]
  %v52 = vld [vmem:[%s0 + $0x130] sm:$0xff]
  %v53 = vld [vmem:[%s0 + $0x138] sm:$0xff]
  %v54 = vld [vmem:[%s0 + $0x140] sm:$0xff]
  %v55 = vld [vmem:[%s0 + $0x148] sm:$0xff]
  %v56 = vld [vmem:[%s0 + $0x150] sm:$0xff]
  %v57 = vld [vmem:[%s0 + $0x158] sm:$0xff]
  %v58 = vld [vmem:[%s0 + $0x160] sm:$0xff]
  %v59 = vld [vmem:[%s0 + $0x168] sm:$0xff]
  %v60 = vld [vmem:[%s0 + $0x170] sm:$0xff]
  %v61 = vld [vmem:[%s0 + $0x178] sm:$0xff]
  %v62 = vld [vmem:[%s0 + $0x180] sm:$0xff]
  %v63 = vld [vmem:[%s0 + $0x188] sm:$0xff]
  %v64 = vld [vmem:[%s0 + $0x190] sm:$0xff]
  %v65 = vld [vmem:[%s0 + $0x198] sm:$0xff]
  %v66 = vld [vmem:[%s0 + $0x1a0] sm:$0xff]
  %v67 = vld [vmem:[%s0 + $0x1a8] sm:$0xff]
  %v68 = vld [vmem:[%s0 + $0x1b0] sm:$0xff]
  %v69 = vld [vmem:[%s0 + $0x1b8] sm:$0xff]
  %v70 = vld [vmem:[%s0 + $0x1c0] sm:$0xff]
  %v71 = vld [vmem:[%s0 + $0x1c8] sm:$0xff]
  %v72 = vld [vmem:[%s0 + $0x1d0] sm:$0xff]
  %v73 = vld [vmem:[%s0 + $0x1d8] sm:$0xff]
  %v74 = vld [vmem:[%s0 + $0x1e0] sm:$0xff]
  %v75 = vld [vmem:[%s0 + $0x1e8] sm:$0xff]
  %v76 = vld [vmem:[%s0 + $0x1f0] sm:$0xff]
  %v77 = vld [vmem:[%s0 + $0x1f8] sm:$0xff]
  %v78 = vmax.f32 %v14, 0.0
  %v79 = vmax.f32 %v15, 0.0
  %v80 = vmax.f32 %v16, 0.0
  %v81 = vmax.f32 %v17, 0.0
  %v82 = vmax.f32 %v18, 0.0
  %v83 = vmax.f32 %v19, 0.0
  %v84 = vmax.f32 %v20, 0.0
  %v85 = vmax.f32 %v21, 0.0
  %v86 = vmax.f32 %v22, 0.0
  %v87 = vmax.f32 %v23, 0.0
  %v88 = vmax.f32 %v24, 0.0
  %v89 = vmax.f32 %v25, 0.0
  %v90 = vmax.f32 %v26, 0.0
  %v91 = vmax.f32 %v27, 0.0
  %v92 = vmax.f32 %v28, 0.0
  %v93 = vmax.f32 %v29, 0.0
  %v94 = vmax.f32 %v30, 0.0
  %v95 = vmax.f32 %v31, 0.0
  %v96 = vmax.f32 %v32, 0.0
  %v97 = vmax.f32 %v33, 0.0
  %v98 = vmax.f32 %v34, 0.0
  %v99 = vmax.f32 %v35, 0.0
  %v100 = vmax.f32 %v36, 0.0
  %v101 = vmax.f32 %v37, 0.0
  %v102 = vmax.f32 %v38, 0.0
  %v103 = vmax.f32 %v39, 0.0
  %v104 = vmax.f32 %v40, 0.0
  %v105 = vmax.f32 %v41, 0.0
  %v106 = vmax.f32 %v42, 0.0
  %v107 = vmax.f32 %v43, 0.0
  %v108 = vmax.f32 %v44, 0.0
  %v109 = vmax.f32 %v45, 0.0
  %v110 = vmax.f32 %v46, 0.0
  %v111 = vmax.f32 %v47, 0.0
  %v112 = vmax.f32 %v48, 0.0
  %v113 = vmax.f32 %v49, 0.0
  %v114 = vmax.f32 %v50, 0.0
  %v115 = vmax.f32 %v51, 0.0
  %v116 = vmax.f32 %v52, 0.0
  %v117 = vmax.f32 %v53, 0.0
  %v118 = vmax.f32 %v54, 0.0
  %v119 = vmax.f32 %v55, 0.0
  %v120 = vmax.f32 %v56, 0.0
  %v121 = vmax.f32 %v57, 0.0
  %v122 = vmax.f32 %v58, 0.0
  %v123 = vmax.f32 %v59, 0.0
  %v124 = vmax.f32 %v60, 0.0
  %v125 = vmax.f32 %v61, 0.0
  %v126 = vmax.f32 %v62, 0.0
  %v127 = vmax.f32 %v63, 0.0
  %v128 = vmax.f32 %v64, 0.0
  %v129 = vmax.f32 %v65, 0.0
  %v130 = vmax.f32 %v66, 0.0
  %v131 = vmax.f32 %v67, 0.0
  %v132 = vmax.f32 %v68, 0.0
  %v133 = vmax.f32 %v69, 0.0
  %v134 = vmax.f32 %v70, 0.0
  %v135 = vmax.f32 %v71, 0.0
  %v136 = vmax.f32 %v72, 0.0
  %v137 = vmax.f32 %v73, 0.0
  %v138 = vmax.f32 %v74, 0.0
  %v139 = vmax.f32 %v75, 0.0
  %v140 = vmax.f32 %v76, 0.0
  %v141 = vmax.f32 %v77, 0.0
  %v142 = vld [vmem:[%s1] sm:$0x1]
  %v143 = vld [vmem:[%s2] sm:$0x1]
  %vm144 = vcmask 31744
  %v145 = vsel %vm144, %v78, 0.0
  %v146 = vsel %vm144, %v79, 0.0
  %v147 = vadd.f32 %v145, %v146
  %v148 = vsel %vm144, %v80, 0.0
  %v149 = vadd.f32 %v147, %v148
  %v150 = vsel %vm144, %v81, 0.0
  %v151 = vadd.f32 %v149, %v150
  %v152 = vsel %vm144, %v82, 0.0
  %v153 = vadd.f32 %v151, %v152
  %v154 = vsel %vm144, %v83, 0.0
  %v155 = vadd.f32 %v153, %v154
  %v156 = vsel %vm144, %v84, 0.0
  %v157 = vadd.f32 %v155, %v156
  %v158 = vsel %vm144, %v85, 0.0
  %v159 = vadd.f32 %v157, %v158
  %v160 = vsel %vm144, %v86, 0.0
  %v161 = vadd.f32 %v159, %v160
  %v162 = vsel %vm144, %v87, 0.0
  %v163 = vadd.f32 %v161, %v162
  %v164 = vsel %vm144, %v88, 0.0
  %v165 = vadd.f32 %v163, %v164
  %v166 = vsel %vm144, %v89, 0.0
  %v167 = vadd.f32 %v165, %v166
  %v168 = vsel %vm144, %v90, 0.0
  %v169 = vadd.f32 %v167, %v168
  %v170 = vsel %vm144, %v91, 0.0
  %v171 = vadd.f32 %v169, %v170
  %v172 = vsel %vm144, %v92, 0.0
  %v173 = vadd.f32 %v171, %v172
  %v174 = vsel %vm144, %v93, 0.0
  %v175 = vadd.f32 %v173, %v174
  %v176 = vsel %vm144, %v94, 0.0
  %v177 = vadd.f32 %v175, %v176
  %v178 = vsel %vm144, %v95, 0.0
  %v179 = vadd.f32 %v177, %v178
  %v180 = vsel %vm144, %v96, 0.0
  %v181 = vadd.f32 %v179, %v180
  %v182 = vsel %vm144, %v97, 0.0
  %v183 = vadd.f32 %v181, %v182
  %v184 = vsel %vm144, %v98, 0.0
  %v185 = vadd.f32 %v183, %v184
  %v186 = vsel %vm144, %v99, 0.0
  %v187 = vadd.f32 %v185, %v186
  %v188 = vsel %vm144, %v100, 0.0
  %v189 = vadd.f32 %v187, %v188
  %v190 = vsel %vm144, %v101, 0.0
  %v191 = vadd.f32 %v189, %v190
  %v192 = vsel %vm144, %v102, 0.0
  %v193 = vadd.f32 %v191, %v192
  %v194 = vsel %vm144, %v103, 0.0
  %v195 = vadd.f32 %v193, %v194
  %v196 = vsel %vm144, %v104, 0.0
  %v197 = vadd.f32 %v195, %v196
  %v198 = vsel %vm144, %v105, 0.0
  %v199 = vadd.f32 %v197, %v198
  %v200 = vsel %vm144, %v106, 0.0
  %v201 = vadd.f32 %v199, %v200
  %v202 = vsel %vm144, %v107, 0.0
  %v203 = vadd.f32 %v201, %v202
  %v204 = vsel %vm144, %v108, 0.0
  %v205 = vadd.f32 %v203, %v204
  %v206 = vsel %vm144, %v109, 0.0
  %v207 = vadd.f32 %v205, %v206
  %v208 = vsel %vm144, %v110, 0.0
  %v209 = vadd.f32 %v207, %v208
  %v210 = vsel %vm144, %v111, 0.0
  %v211 = vadd.f32 %v209, %v210
  %v212 = vsel %vm144, %v112, 0.0
  %v213 = vadd.f32 %v211, %v212
  %v214 = vsel %vm144, %v113, 0.0
  %v215 = vadd.f32 %v213, %v214
  %v216 = vsel %vm144, %v114, 0.0
  %v217 = vadd.f32 %v215, %v216
  %v218 = vsel %vm144, %v115, 0.0
  %v219 = vadd.f32 %v217, %v218
  %v220 = vsel %vm144, %v116, 0.0
  %v221 = vadd.f32 %v219, %v220
  %v222 = vsel %vm144, %v117, 0.0
  %v223 = vadd.f32 %v221, %v222
  %v224 = vsel %vm144, %v118, 0.0
  %v225 = vadd.f32 %v223, %v224
  %v226 = vsel %vm144, %v119, 0.0
  %v227 = vadd.f32 %v225, %v226
  %v228 = vsel %vm144, %v120, 0.0
  %v229 = vadd.f32 %v227, %v228
  %v230 = vsel %vm144, %v121, 0.0
  %v231 = vadd.f32 %v229, %v230
  %v232 = vsel %vm144, %v122, 0.0
  %v233 = vadd.f32 %v231, %v232
  %v234 = vsel %vm144, %v123, 0.0
  %v235 = vadd.f32 %v233, %v234
  %v236 = vsel %vm144, %v124, 0.0
  %v237 = vadd.f32 %v235, %v236
  %v238 = vsel %vm144, %v125, 0.0
  %v239 = vadd.f32 %v237, %v238
  %v240 = vsel %vm144, %v126, 0.0
  %v241 = vadd.f32 %v239, %v240
  %v242 = vsel %vm144, %v127, 0.0
  %v243 = vadd.f32 %v241, %v242
  %v244 = vsel %vm144, %v128, 0.0
  %v245 = vadd.f32 %v243, %v244
  %v246 = vsel %vm144, %v129, 0.0
  %v247 = vadd.f32 %v245, %v246
  %v248 = vsel %vm144, %v130, 0.0
  %v249 = vadd.f32 %v247, %v248
  %v250 = vsel %vm144, %v131, 0.0
  %v251 = vadd.f32 %v249, %v250
  %v252 = vsel %vm144, %v132, 0.0
  %v253 = vadd.f32 %v251, %v252
  %v254 = vsel %vm144, %v133, 0.0
  %v255 = vadd.f32 %v253, %v254
  %v256 = vsel %vm144, %v134, 0.0
  %v257 = vadd.f32 %v255, %v256
  %v258 = vsel %vm144, %v135, 0.0
  %v259 = vadd.f32 %v257, %v258
  %v260 = vsel %vm144, %v136, 0.0
  %v261 = vadd.f32 %v259, %v260
  %v262 = vsel %vm144, %v137, 0.0
  %v263 = vadd.f32 %v261, %v262
  %v264 = vsel %vm144, %v138, 0.0
  %v265 = vadd.f32 %v263, %v264
  %v266 = vsel %vm144, %v139, 0.0
  %v267 = vadd.f32 %v265, %v266
  %v268 = vsel %vm144, %v140, 0.0
  %v269 = vadd.f32 %v267, %v268
  %v270 = vsel %vm144, %v141, 0.0
  %v271 = vadd.f32 %v269, %v270
  %v272 = vrot.slane %v271, 4
  %v273 = vadd.f32 %v271, %v272
  %v274 = vrot.slane %v273, 2
  %v275 = vadd.f32 %v273, %v274
  %v276 = vrot.slane %v275, 1
  %v277 = vadd.f32 %v275, %v276
  %v278 = vmul.f32 %v277, 0.001953125
  %v279 = vsub.f32 %v78, %v278
  %v280 = vsub.f32 %v79, %v278
  %v281 = vsub.f32 %v80, %v278
  %v282 = vsub.f32 %v81, %v278
  %v283 = vsub.f32 %v82, %v278
  %v284 = vsub.f32 %v83, %v278
  %v285 = vsub.f32 %v84, %v278
  %v286 = vsub.f32 %v85, %v278
  %v287 = vsub.f32 %v86, %v278
  %v288 = vsub.f32 %v87, %v278
  %v289 = vsub.f32 %v88, %v278
  %v290 = vsub.f32 %v89, %v278
  %v291 = vsub.f32 %v90, %v278
  %v292 = vsub.f32 %v91, %v278
  %v293 = vsub.f32 %v92, %v278
  %v294 = vsub.f32 %v93, %v278
  %v295 = vsub.f32 %v94, %v278
  %v296 = vsub.f32 %v95, %v278
  %v297 = vsub.f32 %v96, %v278
  %v298 = vsub.f32 %v97, %v278
  %v299 = vsub.f32 %v98, %v278
  %v300 = vsub.f32 %v99, %v278
  %v301 = vsub.f32 %v100, %v278
  %v302 = vsub.f32 %v101, %v278
  %v303 = vsub.f32 %v102, %v278
  %v304 = vsub.f32 %v103, %v278
  %v305 = vsub.f32 %v104, %v278
  %v306 = vsub.f32 %v105, %v278
  %v307 = vsub.f32 %v106, %v278
  %v308 = vsub.f32 %v107, %v278
  %v309 = vsub.f32 %v108, %v278
  %v310 = vsub.f32 %v109, %v278
  %v311 = vsub.f32 %v110, %v278
  %v312 = vsub.f32 %v111, %v278
  %v313 = vsub.f32 %v112, %v278
  %v314 = vsub.f32 %v113, %v278
  %v315 = vsub.f32 %v114, %v278
  %v316 = vsub.f32 %v115, %v278
  %v317 = vsub.f32 %v116, %v278
  %v318 = vsub.f32 %v117, %v278
  %v319 = vsub.f32 %v118, %v278
  %v320 = vsub.f32 %v119, %v278
  %v321 = vsub.f32 %v120, %v278
  %v322 = vsub.f32 %v121, %v278
  %v323 = vsub.f32 %v122, %v278
  %v324 = vsub.f32 %v123, %v278
  %v325 = vsub.f32 %v124, %v278
  %v326 = vsub.f32 %v125, %v278
  %v327 = vsub.f32 %v126, %v278
  %v328 = vsub.f32 %v127, %v278
  %v329 = vsub.f32 %v128, %v278
  %v330 = vsub.f32 %v129, %v278
  %v331 = vsub.f32 %v130, %v278
  %v332 = vsub.f32 %v131, %v278
  %v333 = vsub.f32 %v132, %v278
  %v334 = vsub.f32 %v133, %v278
  %v335 = vsub.f32 %v134, %v278
  %v336 = vsub.f32 %v135, %v278
  %v337 = vsub.f32 %v136, %v278
  %v338 = vsub.f32 %v137, %v278
  %v339 = vsub.f32 %v138, %v278
  %v340 = vsub.f32 %v139, %v278
  %v341 = vsub.f32 %v140, %v278
  %v342 = vsub.f32 %v141, %v278
  %v343 = vmul.f32 %v279, %v279
  %v344 = vmul.f32 %v280, %v280
  %v345 = vmul.f32 %v281, %v281
  %v346 = vmul.f32 %v282, %v282
  %v347 = vmul.f32 %v283, %v283
  %v348 = vmul.f32 %v284, %v284
  %v349 = vmul.f32 %v285, %v285
  %v350 = vmul.f32 %v286, %v286
  %v351 = vmul.f32 %v287, %v287
  %v352 = vmul.f32 %v288, %v288
  %v353 = vmul.f32 %v289, %v289
  %v354 = vmul.f32 %v290, %v290
  %v355 = vmul.f32 %v291, %v291
  %v356 = vmul.f32 %v292, %v292
  %v357 = vmul.f32 %v293, %v293
  %v358 = vmul.f32 %v294, %v294
  %v359 = vmul.f32 %v295, %v295
  %v360 = vmul.f32 %v296, %v296
  %v361 = vmul.f32 %v297, %v297
  %v362 = vmul.f32 %v298, %v298
  %v363 = vmul.f32 %v299, %v299
  %v364 = vmul.f32 %v300, %v300
  %v365 = vmul.f32 %v301, %v301
  %v366 = vmul.f32 %v302, %v302
  %v367 = vmul.f32 %v303, %v303
  %v368 = vmul.f32 %v304, %v304
  %v369 = vmul.f32 %v305, %v305
  %v370 = vmul.f32 %v306, %v306
  %v371 = vmul.f32 %v307, %v307
  %v372 = vmul.f32 %v308, %v308
  %v373 = vmul.f32 %v309, %v309
  %v374 = vmul.f32 %v310, %v310
  %v375 = vmul.f32 %v311, %v311
  %v376 = vmul.f32 %v312, %v312
  %v377 = vmul.f32 %v313, %v313
  %v378 = vmul.f32 %v314, %v314
  %v379 = vmul.f32 %v315, %v315
  %v380 = vmul.f32 %v316, %v316
  %v381 = vmul.f32 %v317, %v317
  %v382 = vmul.f32 %v318, %v318
  %v383 = vmul.f32 %v319, %v319
  %v384 = vmul.f32 %v320, %v320
  %v385 = vmul.f32 %v321, %v321
  %v386 = vmul.f32 %v322, %v322
  %v387 = vmul.f32 %v323, %v323
  %v388 = vmul.f32 %v324, %v324
  %v389 = vmul.f32 %v325, %v325
  %v390 = vmul.f32 %v326, %v326
  %v391 = vmul.f32 %v327, %v327
  %v392 = vmul.f32 %v328, %v328
  %v393 = vmul.f32 %v329, %v329
  %v394 = vmul.f32 %v330, %v330
  %v395 = vmul.f32 %v331, %v331
  %v396 = vmul.f32 %v332, %v332
  %v397 = vmul.f32 %v333, %v333
  %v398 = vmul.f32 %v334, %v334
  %v399 = vmul.f32 %v335, %v335
  %v400 = vmul.f32 %v336, %v336
  %v401 = vmul.f32 %v337, %v337
  %v402 = vmul.f32 %v338, %v338
  %v403 = vmul.f32 %v339, %v339
  %v404 = vmul.f32 %v340, %v340
  %v405 = vmul.f32 %v341, %v341
  %v406 = vmul.f32 %v342, %v342
  %v407 = vsel %vm144, %v343, 0.0
  %v408 = vsel %vm144, %v344, 0.0
  %v409 = vadd.f32 %v407, %v408
  %v410 = vsel %vm144, %v345, 0.0
  %v411 = vadd.f32 %v409, %v410
  %v412 = vsel %vm144, %v346, 0.0
  %v413 = vadd.f32 %v411, %v412
  %v414 = vsel %vm144, %v347, 0.0
  %v415 = vadd.f32 %v413, %v414
  %v416 = vsel %vm144, %v348, 0.0
  %v417 = vadd.f32 %v415, %v416
  %v418 = vsel %vm144, %v349, 0.0
  %v419 = vadd.f32 %v417, %v418
  %v420 = vsel %vm144, %v350, 0.0
  %v421 = vadd.f32 %v419, %v420
  %v422 = vsel %vm144, %v351, 0.0
  %v423 = vadd.f32 %v421, %v422
  %v424 = vsel %vm144, %v352, 0.0
  %v425 = vadd.f32 %v423, %v424
  %v426 = vsel %vm144, %v353, 0.0
  %v427 = vadd.f32 %v425, %v426
  %v428 = vsel %vm144, %v354, 0.0
  %v429 = vadd.f32 %v427, %v428
  %v430 = vsel %vm144, %v355, 0.0
  %v431 = vadd.f32 %v429, %v430
  %v432 = vsel %vm144, %v356, 0.0
  %v433 = vadd.f32 %v431, %v432
  %v434 = vsel %vm144, %v357, 0.0
  %v435 = vadd.f32 %v433, %v434
  %v436 = vsel %vm144, %v358, 0.0
  %v437 = vadd.f32 %v435, %v436
  %v438 = vsel %vm144, %v359, 0.0
  %v439 = vadd.f32 %v437, %v438
  %v440 = vsel %vm144, %v360, 0.0
  %v441 = vadd.f32 %v439, %v440
  %v442 = vsel %vm144, %v361, 0.0
  %v443 = vadd.f32 %v441, %v442
  %v444 = vsel %vm144, %v362, 0.0
  %v445 = vadd.f32 %v443, %v444
  %v446 = vsel %vm144, %v363, 0.0
  %v447 = vadd.f32 %v445, %v446
  %v448 = vsel %vm144, %v364, 0.0
  %v449 = vadd.f32 %v447, %v448
  %v450 = vsel %vm144, %v365, 0.0
  %v451 = vadd.f32 %v449, %v450
  %v452 = vsel %vm144, %v366, 0.0
  %v453 = vadd.f32 %v451, %v452
  %v454 = vsel %vm144, %v367, 0.0
  %v455 = vadd.f32 %v453, %v454
  %v456 = vsel %vm144, %v368, 0.0
  %v457 = vadd.f32 %v455, %v456
  %v458 = vsel %vm144, %v369, 0.0
  %v459 = vadd.f32 %v457, %v458
  %v460 = vsel %vm144, %v370, 0.0
  %v461 = vadd.f32 %v459, %v460
  %v462 = vsel %vm144, %v371, 0.0
  %v463 = vadd.f32 %v461, %v462
  %v464 = vsel %vm144, %v372, 0.0
  %v465 = vadd.f32 %v463, %v464
  %v466 = vsel %vm144, %v373, 0.0
  %v467 = vadd.f32 %v465, %v466
  %v468 = vsel %vm144, %v374, 0.0
  %v469 = vadd.f32 %v467, %v468
  %v470 = vsel %vm144, %v375, 0.0
  %v471 = vadd.f32 %v469, %v470
  %v472 = vsel %vm144, %v376, 0.0
  %v473 = vadd.f32 %v471, %v472
  %v474 = vsel %vm144, %v377, 0.0
  %v475 = vadd.f32 %v473, %v474
  %v476 = vsel %vm144, %v378, 0.0
  %v477 = vadd.f32 %v475, %v476
  %v478 = vsel %vm144, %v379, 0.0
  %v479 = vadd.f32 %v477, %v478
  %v480 = vsel %vm144, %v380, 0.0
  %v481 = vadd.f32 %v479, %v480
  %v482 = vsel %vm144, %v381, 0.0
  %v483 = vadd.f32 %v481, %v482
  %v484 = vsel %vm144, %v382, 0.0
  %v485 = vadd.f32 %v483, %v484
  %v486 = vsel %vm144, %v383, 0.0
  %v487 = vadd.f32 %v485, %v486
  %v488 = vsel %vm144, %v384, 0.0
  %v489 = vadd.f32 %v487, %v488
  %v490 = vsel %vm144, %v385, 0.0
  %v491 = vadd.f32 %v489, %v490
  %v492 = vsel %vm144, %v386, 0.0
  %v493 = vadd.f32 %v491, %v492
  %v494 = vsel %vm144, %v387, 0.0
  %v495 = vadd.f32 %v493, %v494
  %v496 = vsel %vm144, %v388, 0.0
  %v497 = vadd.f32 %v495, %v496
  %v498 = vsel %vm144, %v389, 0.0
  %v499 = vadd.f32 %v497, %v498
  %v500 = vsel %vm144, %v390, 0.0
  %v501 = vadd.f32 %v499, %v500
  %v502 = vsel %vm144, %v391, 0.0
  %v503 = vadd.f32 %v501, %v502
  %v504 = vsel %vm144, %v392, 0.0
  %v505 = vadd.f32 %v503, %v504
  %v506 = vsel %vm144, %v393, 0.0
  %v507 = vadd.f32 %v505, %v506
  %v508 = vsel %vm144, %v394, 0.0
  %v509 = vadd.f32 %v507, %v508
  %v510 = vsel %vm144, %v395, 0.0
  %v511 = vadd.f32 %v509, %v510
  %v512 = vsel %vm144, %v396, 0.0
  %v513 = vadd.f32 %v511, %v512
  %v514 = vsel %vm144, %v397, 0.0
  %v515 = vadd.f32 %v513, %v514
  %v516 = vsel %vm144, %v398, 0.0
  %v517 = vadd.f32 %v515, %v516
  %v518 = vsel %vm144, %v399, 0.0
  %v519 = vadd.f32 %v517, %v518
  %v520 = vsel %vm144, %v400, 0.0
  %v521 = vadd.f32 %v519, %v520
  %v522 = vsel %vm144, %v401, 0.0
  %v523 = vadd.f32 %v521, %v522
  %v524 = vsel %vm144, %v402, 0.0
  %v525 = vadd.f32 %v523, %v524
  %v526 = vsel %vm144, %v403, 0.0
  %v527 = vadd.f32 %v525, %v526
  %v528 = vsel %vm144, %v404, 0.0
  %v529 = vadd.f32 %v527, %v528
  %v530 = vsel %vm144, %v405, 0.0
  %v531 = vadd.f32 %v529, %v530
  %v532 = vsel %vm144, %v406, 0.0
  %v533 = vadd.f32 %v531, %v532
  %v534 = vrot.slane %v533, 4
  %v535 = vadd.f32 %v533, %v534
  %v536 = vrot.slane %v535, 2
  %v537 = vadd.f32 %v535, %v536
  %v538 = vrot.slane %v537, 1
  %v539 = vadd.f32 %v537, %v538
  %v540 = vmul.f32 %v539, 0.001953125
  %v541 = vadd.f32 %v540, 1e-05
  %v542 = vrsqrt.pop %v541
  %v543 = vmul.f32 %v542, %v541
  %v544 = vmul.f32 %v543, %v542
  %v545 = vmul.f32 0.5, %v544
  %v546 = vsub.f32 1.5, %v545
  %v547 = vmul.f32 %v542, %v546
  %vm548 = vweird.f32 %v541
  %vm549 = vweird.f32 %v542
  %vm550 = vmor %vm548, %vm549
  %v551 = vsel %vm550, %v542, %v547
  %v552 = vmul.f32 %v279, %v551
  %v553 = vmul.f32 %v280, %v551
  %v554 = vmul.f32 %v281, %v551
  %v555 = vmul.f32 %v282, %v551
  %v556 = vmul.f32 %v283, %v551
  %v557 = vmul.f32 %v284, %v551
  %v558 = vmul.f32 %v285, %v551
  %v559 = vmul.f32 %v286, %v551
  %v560 = vmul.f32 %v287, %v551
  %v561 = vmul.f32 %v288, %v551
  %v562 = vmul.f32 %v289, %v551
  %v563 = vmul.f32 %v290, %v551
  %v564 = vmul.f32 %v291, %v551
  %v565 = vmul.f32 %v292, %v551
  %v566 = vmul.f32 %v293, %v551
  %v567 = vmul.f32 %v294, %v551
  %v568 = vmul.f32 %v295, %v551
  %v569 = vmul.f32 %v296, %v551
  %v570 = vmul.f32 %v297, %v551
  %v571 = vmul.f32 %v298, %v551
  %v572 = vmul.f32 %v299, %v551
  %v573 = vmul.f32 %v300, %v551
  %v574 = vmul.f32 %v301, %v551
  %v575 = vmul.f32 %v302, %v551
  %v576 = vmul.f32 %v303, %v551
  %v577 = vmul.f32 %v304, %v551
  %v578 = vmul.f32 %v305, %v551
  %v579 = vmul.f32 %v306, %v551
  %v580 = vmul.f32 %v307, %v551
  %v581 = vmul.f32 %v308, %v551
  %v582 = vmul.f32 %v309, %v551
  %v583 = vmul.f32 %v310, %v551
  %v584 = vmul.f32 %v311, %v551
  %v585 = vmul.f32 %v312, %v551
  %v586 = vmul.f32 %v313, %v551
  %v587 = vmul.f32 %v314, %v551
  %v588 = vmul.f32 %v315, %v551
  %v589 = vmul.f32 %v316, %v551
  %v590 = vmul.f32 %v317, %v551
  %v591 = vmul.f32 %v318, %v551
  %v592 = vmul.f32 %v319, %v551
  %v593 = vmul.f32 %v320, %v551
  %v594 = vmul.f32 %v321, %v551
  %v595 = vmul.f32 %v322, %v551
  %v596 = vmul.f32 %v323, %v551
  %v597 = vmul.f32 %v324, %v551
  %v598 = vmul.f32 %v325, %v551
  %v599 = vmul.f32 %v326, %v551
  %v600 = vmul.f32 %v327, %v551
  %v601 = vmul.f32 %v328, %v551
  %v602 = vmul.f32 %v329, %v551
  %v603 = vmul.f32 %v330, %v551
  %v604 = vmul.f32 %v331, %v551
  %v605 = vmul.f32 %v332, %v551
  %v606 = vmul.f32 %v333, %v551
  %v607 = vmul.f32 %v334, %v551
  %v608 = vmul.f32 %v335, %v551
  %v609 = vmul.f32 %v336, %v551
  %v610 = vmul.f32 %v337, %v551
  %v611 = vmul.f32 %v338, %v551
  %v612 = vmul.f32 %v339, %v551
  %v613 = vmul.f32 %v340, %v551
  %v614 = vmul.f32 %v341, %v551
  %v615 = vmul.f32 %v342, %v551
  %v617 = vperm.slane %v142, 0
  %v619 = vmul.f32 %v552, %v617
  %v620 = vmul.f32 %v553, %v617
  %v621 = vmul.f32 %v554, %v617
  %v622 = vmul.f32 %v555, %v617
  %v623 = vmul.f32 %v556, %v617
  %v624 = vmul.f32 %v557, %v617
  %v625 = vmul.f32 %v558, %v617
  %v626 = vmul.f32 %v559, %v617
  %v627 = vmul.f32 %v560, %v617
  %v628 = vmul.f32 %v561, %v617
  %v629 = vmul.f32 %v562, %v617
  %v630 = vmul.f32 %v563, %v617
  %v631 = vmul.f32 %v564, %v617
  %v632 = vmul.f32 %v565, %v617
  %v633 = vmul.f32 %v566, %v617
  %v634 = vmul.f32 %v567, %v617
  %v635 = vmul.f32 %v568, %v617
  %v636 = vmul.f32 %v569, %v617
  %v637 = vmul.f32 %v570, %v617
  %v638 = vmul.f32 %v571, %v617
  %v639 = vmul.f32 %v572, %v617
  %v640 = vmul.f32 %v573, %v617
  %v641 = vmul.f32 %v574, %v617
  %v642 = vmul.f32 %v575, %v617
  %v643 = vmul.f32 %v576, %v617
  %v644 = vmul.f32 %v577, %v617
  %v645 = vmul.f32 %v578, %v617
  %v646 = vmul.f32 %v579, %v617
  %v647 = vmul.f32 %v580, %v617
  %v648 = vmul.f32 %v581, %v617
  %v649 = vmul.f32 %v582, %v617
  %v650 = vmul.f32 %v583, %v617
  %v651 = vmul.f32 %v584, %v617
  %v652 = vmul.f32 %v585, %v617
  %v653 = vmul.f32 %v586, %v617
  %v654 = vmul.f32 %v587, %v617
  %v655 = vmul.f32 %v588, %v617
  %v656 = vmul.f32 %v589, %v617
  %v657 = vmul.f32 %v590, %v617
  %v658 = vmul.f32 %v591, %v617
  %v659 = vmul.f32 %v592, %v617
  %v660 = vmul.f32 %v593, %v617
  %v661 = vmul.f32 %v594, %v617
  %v662 = vmul.f32 %v595, %v617
  %v663 = vmul.f32 %v596, %v617
  %v664 = vmul.f32 %v597, %v617
  %v665 = vmul.f32 %v598, %v617
  %v666 = vmul.f32 %v599, %v617
  %v667 = vmul.f32 %v600, %v617
  %v668 = vmul.f32 %v601, %v617
  %v669 = vmul.f32 %v602, %v617
  %v670 = vmul.f32 %v603, %v617
  %v671 = vmul.f32 %v604, %v617
  %v672 = vmul.f32 %v605, %v617
  %v673 = vmul.f32 %v606, %v617
  %v674 = vmul.f32 %v607, %v617
  %v675 = vmul.f32 %v608, %v617
  %v676 = vmul.f32 %v609, %v617
  %v677 = vmul.f32 %v610, %v617
  %v678 = vmul.f32 %v611, %v617
  %v679 = vmul.f32 %v612, %v617
  %v680 = vmul.f32 %v613, %v617
  %v681 = vmul.f32 %v614, %v617
  %v682 = vmul.f32 %v615, %v617
  %v684 = vperm.slane %v143, 0
  %v686 = vadd.f32 %v619, %v684
  %v687 = vadd.f32 %v620, %v684
  %v688 = vadd.f32 %v621, %v684
  %v689 = vadd.f32 %v622, %v684
  %v690 = vadd.f32 %v623, %v684
  %v691 = vadd.f32 %v624, %v684
  %v692 = vadd.f32 %v625, %v684
  %v693 = vadd.f32 %v626, %v684
  %v694 = vadd.f32 %v627, %v684
  %v695 = vadd.f32 %v628, %v684
  %v696 = vadd.f32 %v629, %v684
  %v697 = vadd.f32 %v630, %v684
  %v698 = vadd.f32 %v631, %v684
  %v699 = vadd.f32 %v632, %v684
  %v700 = vadd.f32 %v633, %v684
  %v701 = vadd.f32 %v634, %v684
  %v702 = vadd.f32 %v635, %v684
  %v703 = vadd.f32 %v636, %v684
  %v704 = vadd.f32 %v637, %v684
  %v705 = vadd.f32 %v638, %v684
  %v706 = vadd.f32 %v639, %v684
  %v707 = vadd.f32 %v640, %v684
  %v708 = vadd.f32 %v641, %v684
  %v709 = vadd.f32 %v642, %v684
  %v710 = vadd.f32 %v643, %v684
  %v711 = vadd.f32 %v644, %v684
  %v712 = vadd.f32 %v645, %v684
  %v713 = vadd.f32 %v646, %v684
  %v714 = vadd.f32 %v647, %v684
  %v715 = vadd.f32 %v648, %v684
  %v716 = vadd.f32 %v649, %v684
  %v717 = vadd.f32 %v650, %v684
  %v718 = vadd.f32 %v651, %v684
  %v719 = vadd.f32 %v652, %v684
  %v720 = vadd.f32 %v653, %v684
  %v721 = vadd.f32 %v654, %v684
  %v722 = vadd.f32 %v655, %v684
  %v723 = vadd.f32 %v656, %v684
  %v724 = vadd.f32 %v657, %v684
  %v725 = vadd.f32 %v658, %v684
  %v726 = vadd.f32 %v659, %v684
  %v727 = vadd.f32 %v660, %v684
  %v728 = vadd.f32 %v661, %v684
  %v729 = vadd.f32 %v662, %v684
  %v730 = vadd.f32 %v663, %v684
  %v731 = vadd.f32 %v664, %v684
  %v732 = vadd.f32 %v665, %v684
  %v733 = vadd.f32 %v666, %v684
  %v734 = vadd.f32 %v667, %v684
  %v735 = vadd.f32 %v668, %v684
  %v736 = vadd.f32 %v669, %v684
  %v737 = vadd.f32 %v670, %v684
  %v738 = vadd.f32 %v671, %v684
  %v739 = vadd.f32 %v672, %v684
  %v740 = vadd.f32 %v673, %v684
  %v741 = vadd.f32 %v674, %v684
  %v742 = vadd.f32 %v675, %v684
  %v743 = vadd.f32 %v676, %v684
  %v744 = vadd.f32 %v677, %v684
  %v745 = vadd.f32 %v678, %v684
  %v746 = vadd.f32 %v679, %v684
  %v747 = vadd.f32 %v680, %v684
  %v748 = vadd.f32 %v681, %v684
  %v749 = vadd.f32 %v682, %v684
  %750 = vst.msk [vmem:[%s3] sm:$0xff] %vm144, %v686
  %751 = vst.msk [vmem:[%s3 + $0x8] sm:$0xff] %vm144, %v687
  %752 = vst.msk [vmem:[%s3 + $0x10] sm:$0xff] %vm144, %v688
  %753 = vst.msk [vmem:[%s3 + $0x18] sm:$0xff] %vm144, %v689
  %754 = vst.msk [vmem:[%s3 + $0x20] sm:$0xff] %vm144, %v690
  %755 = vst.msk [vmem:[%s3 + $0x28] sm:$0xff] %vm144, %v691
  %756 = vst.msk [vmem:[%s3 + $0x30] sm:$0xff] %vm144, %v692
  %757 = vst.msk [vmem:[%s3 + $0x38] sm:$0xff] %vm144, %v693
  %758 = vst.msk [vmem:[%s3 + $0x40] sm:$0xff] %vm144, %v694
  %759 = vst.msk [vmem:[%s3 + $0x48] sm:$0xff] %vm144, %v695
  %760 = vst.msk [vmem:[%s3 + $0x50] sm:$0xff] %vm144, %v696
  %761 = vst.msk [vmem:[%s3 + $0x58] sm:$0xff] %vm144, %v697
  %762 = vst.msk [vmem:[%s3 + $0x60] sm:$0xff] %vm144, %v698
  %763 = vst.msk [vmem:[%s3 + $0x68] sm:$0xff] %vm144, %v699
  %764 = vst.msk [vmem:[%s3 + $0x70] sm:$0xff] %vm144, %v700
  %765 = vst.msk [vmem:[%s3 + $0x78] sm:$0xff] %vm144, %v701
  %766 = vst.msk [vmem:[%s3 + $0x80] sm:$0xff] %vm144, %v702
  %767 = vst.msk [vmem:[%s3 + $0x88] sm:$0xff] %vm144, %v703
  %768 = vst.msk [vmem:[%s3 + $0x90] sm:$0xff] %vm144, %v704
  %769 = vst.msk [vmem:[%s3 + $0x98] sm:$0xff] %vm144, %v705
  %770 = vst.msk [vmem:[%s3 + $0xa0] sm:$0xff] %vm144, %v706
  %771 = vst.msk [vmem:[%s3 + $0xa8] sm:$0xff] %vm144, %v707
  %772 = vst.msk [vmem:[%s3 + $0xb0] sm:$0xff] %vm144, %v708
  %773 = vst.msk [vmem:[%s3 + $0xb8] sm:$0xff] %vm144, %v709
  %774 = vst.msk [vmem:[%s3 + $0xc0] sm:$0xff] %vm144, %v710
  %775 = vst.msk [vmem:[%s3 + $0xc8] sm:$0xff] %vm144, %v711
  %776 = vst.msk [vmem:[%s3 + $0xd0] sm:$0xff] %vm144, %v712
  %777 = vst.msk [vmem:[%s3 + $0xd8] sm:$0xff] %vm144, %v713
  %778 = vst.msk [vmem:[%s3 + $0xe0] sm:$0xff] %vm144, %v714
  %779 = vst.msk [vmem:[%s3 + $0xe8] sm:$0xff] %vm144, %v715
  %780 = vst.msk [vmem:[%s3 + $0xf0] sm:$0xff] %vm144, %v716
  %781 = vst.msk [vmem:[%s3 + $0xf8] sm:$0xff] %vm144, %v717
  %782 = vst.msk [vmem:[%s3 + $0x100] sm:$0xff] %vm144, %v718
  %783 = vst.msk [vmem:[%s3 + $0x108] sm:$0xff] %vm144, %v719
  %784 = vst.msk [vmem:[%s3 + $0x110] sm:$0xff] %vm144, %v720
  %785 = vst.msk [vmem:[%s3 + $0x118] sm:$0xff] %vm144, %v721
  %786 = vst.msk [vmem:[%s3 + $0x120] sm:$0xff] %vm144, %v722
  %787 = vst.msk [vmem:[%s3 + $0x128] sm:$0xff] %vm144, %v723
  %788 = vst.msk [vmem:[%s3 + $0x130] sm:$0xff] %vm144, %v724
  %789 = vst.msk [vmem:[%s3 + $0x138] sm:$0xff] %vm144, %v725
  %790 = vst.msk [vmem:[%s3 + $0x140] sm:$0xff] %vm144, %v726
  %791 = vst.msk [vmem:[%s3 + $0x148] sm:$0xff] %vm144, %v727
  %792 = vst.msk [vmem:[%s3 + $0x150] sm:$0xff] %vm144, %v728
  %793 = vst.msk [vmem:[%s3 + $0x158] sm:$0xff] %vm144, %v729
  %794 = vst.msk [vmem:[%s3 + $0x160] sm:$0xff] %vm144, %v730
  %795 = vst.msk [vmem:[%s3 + $0x168] sm:$0xff] %vm144, %v731
  %796 = vst.msk [vmem:[%s3 + $0x170] sm:$0xff] %vm144, %v732
  %797 = vst.msk [vmem:[%s3 + $0x178] sm:$0xff] %vm144, %v733
  %798 = vst.msk [vmem:[%s3 + $0x180] sm:$0xff] %vm144, %v734
  %799 = vst.msk [vmem:[%s3 + $0x188] sm:$0xff] %vm144, %v735
  %800 = vst.msk [vmem:[%s3 + $0x190] sm:$0xff] %vm144, %v736
  %801 = vst.msk [vmem:[%s3 + $0x198] sm:$0xff] %vm144, %v737
  %802 = vst.msk [vmem:[%s3 + $0x1a0] sm:$0xff] %vm144, %v738
  %803 = vst.msk [vmem:[%s3 + $0x1a8] sm:$0xff] %vm144, %v739
  %804 = vst.msk [vmem:[%s3 + $0x1b0] sm:$0xff] %vm144, %v740
  %805 = vst.msk [vmem:[%s3 + $0x1b8] sm:$0xff] %vm144, %v741
  %806 = vst.msk [vmem:[%s3 + $0x1c0] sm:$0xff] %vm144, %v742
  %807 = vst.msk [vmem:[%s3 + $0x1c8] sm:$0xff] %vm144, %v743
  %808 = vst.msk [vmem:[%s3 + $0x1d0] sm:$0xff] %vm144, %v744
  %809 = vst.msk [vmem:[%s3 + $0x1d8] sm:$0xff] %vm144, %v745
  %810 = vst.msk [vmem:[%s3 + $0x1e0] sm:$0xff] %vm144, %v746
  %811 = vst.msk [vmem:[%s3 + $0x1e8] sm:$0xff] %vm144, %v747
  %812 = vst.msk [vmem:[%s3 + $0x1f0] sm:$0xff] %vm144, %v748
  %813 = vst.msk [vmem:[%s3 + $0x1f8] sm:$0xff] %vm144, %v749
  // Predicated region
  $region14: #{_lambda_.16} parent=0 // pred_check
    _
  $region15: #{_lambda_.16} parent=0 // pred_check_branch
    %815 = sbr.rel (0) target = $region17
  $region16: #{_lambda_.16} parent=0 // pred_region
    _
  $region17: #{_lambda_.16} parent=0 // pred_fallthru
    _
  // Predicated region
  $region18: #{_lambda_.16} parent=0 // pred_check
    _
  $region19: #{_lambda_.16} parent=0 // pred_check_branch
    %817 = sbr.rel (0) target = $region21
  $region20: #{_lambda_.16} parent=0 // pred_region
    _
  $region21: #{_lambda_.16} parent=0 // pred_fallthru
    _

</llo_original>
